<compile_context>
chip_gen: v6e
topology: v6e:2x2x1
jax: 0.10.0
libtpu: 0.0.40
codegen_flags: <defaults>
</compile_context>

<pallas_src>
import functools

import jax
import jax.numpy as jnp
from jax.experimental import pallas as pl
from jax.experimental.pallas import tpu as pltpu

MAX_LOGSTD = 10.0
LEAKY_SLOPE = 0.01  # nn.LeakyReLU default negative_slope
HIDDEN = 128        # MLP hidden width from the PyTorch module


def _lrelu(x):
    return jnp.where(x > 0, x, LEAKY_SLOPE * x)


def vgae_head_kernel(h_ref, w1_ref, w2_ref, w3_ref, wh_ref, bias_ref, out_ref,
                     *, B, N, L, H):
    """Fused VGAE head. All refs are whole-array VMEM blocks.

    h_ref    [B*N, C]  bf16  flattened node embeddings
    w1_ref   [C, 2H]   bf16  [wg1 | we1]
    w2_ref   [2H, 2H]  bf16  block-diag(wg2, we2)
    w3_ref   [2H, H]   bf16  end output -> lanes 0:C, gate score -> lane H-1
    wh_ref   [H, H]    bf16  mu -> lanes 0:L, logvar -> lanes L:2L, rest zero
    bias_ref [4, 2H]   f32   rows: layer1 / layer2 / layer3 / head biases
    out_ref  [B, H]    f32   lane-dense output (mu | logvar | zero padding)
    """
    bf16 = jnp.bfloat16
    f32 = jnp.float32

    h = h_ref[...]                                       # [B*N, C] bf16
    b_all = bias_ref[...]                                # [4, 2H] f32
    b1 = b_all[0:1, :]                                   # [1, 2H]
    b2 = b_all[1:2, :]                                   # [1, 2H]
    b3 = b_all[2:3, 0:H]                                 # [1, H]
    bh = b_all[3:4, 0:H]                                 # [1, H]

    # Fused gate+end MLP: three wide bf16 MXU matmuls, f32 accumulation.
    a1 = _lrelu(jnp.dot(h, w1_ref[...],
                        preferred_element_type=f32) + b1)            # [B*N, 2H]
    a2 = _lrelu(jnp.dot(a1.astype(bf16), w2_ref[...],
                        preferred_element_type=f32) + b2)            # [B*N, 2H]
    u3 = (jnp.dot(a2.astype(bf16), w3_ref[...],
                  preferred_element_type=f32) + b3)                  # [B*N, H]
    # u3 lanes: 0:C end-MLP output, H-2 == 1.0 (denominator lane), H-1 gate.

    BN = B * N
    g = u3[:, H - 1:H]                                               # [B*N, 1]

    # Per-graph (segment) softmax over the gate lane. The block-diagonal
    # selector is generated in-register (no extra DMA).
    node = jax.lax.broadcasted_iota(jnp.int32, (BN, B), 0)
    graph = jax.lax.broadcasted_iota(jnp.int32, (BN, B), 1)
    seg = jnp.logical_and(node >= graph * N, node < (graph + 1) * N)  # [B*N, B]
    st = seg.astype(f32)
    gmax = jnp.max(jnp.where(seg, g, -1e30), axis=0, keepdims=True)   # [1, B]
    gmax_node = jnp.sum(st * gmax, axis=1, keepdims=True)             # [B*N, 1]
    eg = jnp.exp(g - gmax_node)                                       # [B*N, 1]

    # Attention pooling on the MXU: one segment matmul pools eg*u3 per graph.
    # The constant-1 lane (H-2) pools to the softmax denominator for free.
    pooled = jax.lax.dot_general(st, eg * u3, (((0,), (0,)), ((), ())),
                                 preferred_element_type=f32)          # [B, H]
    denom = pooled[:, H - 2:H - 1]                                    # [B, 1]
    xg = pooled / denom                                               # exact divide

    # Fused mu|logvar head; clamp only the logvar lanes (>= L).
    head = (jnp.dot(xg.astype(bf16), wh_ref[...],
                    preferred_element_type=f32) + bh)                 # [B, H]
    lane = jax.lax.broadcasted_iota(jnp.int32, head.shape, 1)
    out_ref[...] = jnp.where(lane >= L, jnp.minimum(head, MAX_LOGSTD), head)


def pack_vgae_params(p, C, L, H=HIDDEN):
    """Pack the 16 Linear weights/biases into 5 fused bf16 weights + 1 f32 bias slab."""
    # Static layout asserts (review correctness concern #3).
    assert C <= H - 2, "need lanes 0:C for end output plus denom/gate lanes H-2, H-1"
    assert 2 * L <= H, "mu|logvar must fit in one 128-lane output tile"

    f32, bf16 = jnp.float32, jnp.bfloat16
    W1 = jnp.concatenate([p["wg1"], p["we1"]], axis=1)                 # [C, 2H]
    b1 = jnp.concatenate([p["bg1"], p["be1"]], axis=1)                 # [1, 2H]

    W2 = jnp.zeros((2 * H, 2 * H), f32)
    W2 = W2.at[:H, :H].set(p["wg2"]).at[H:, H:].set(p["we2"])          # block-diag
    b2 = jnp.concatenate([p["bg2"], p["be2"]], axis=1)                 # [1, 2H]

    # Layer 3 narrowed to one 128-lane output tile.
    W3 = jnp.zeros((2 * H, H), f32)
    W3 = W3.at[H:, :C].set(p["we3"]).at[:H, H - 1:H].set(p["wg3"])
    b3 = jnp.zeros((1, H), f32)
    b3 = b3.at[:, :C].set(p["be3"]).at[:, H - 1:H].set(p["bg3"])
    b3 = b3.at[:, H - 2].set(1.0)          # constant-1 lane -> pooled denominator

    # Fused mu|logvar head, one 128-lane tile; rows C:H zero kill extra pooled lanes.
    WH = jnp.zeros((H, H), f32)
    WH = WH.at[:C, :L].set(p["wmu"]).at[:C, L:2 * L].set(p["wsig"])
    bh = jnp.zeros((1, H), f32)
    bh = bh.at[:, :L].set(p["bmu"]).at[:, L:2 * L].set(p["bsig"])

    pad = jnp.zeros((1, H), f32)
    BIAS = jnp.concatenate([b1, b2,
                            jnp.concatenate([b3, pad], axis=1),
                            jnp.concatenate([bh, pad], axis=1)], axis=0)  # [4, 2H]

    return {"W1": W1.astype(bf16), "W2": W2.astype(bf16), "W3": W3.astype(bf16),
            "WH": WH.astype(bf16), "BIAS": BIAS}


def vgae_encode(h, packed, *, latent_dims):
    """h: [B, N, C] node embeddings (equal-sized graphs). Returns (z, mu, logvar, h)."""
    B, N, C = h.shape
    L = latent_dims
    H = HIDDEN
    h_flat = h.reshape(B * N, C).astype(jnp.bfloat16)   # bf16 input slab

    kernel = functools.partial(vgae_head_kernel, B=B, N=N, L=L, H=H)
    vmem = lambda: pl.BlockSpec(memory_space=pltpu.MemorySpace.VMEM)

    inputs = (h_flat, packed["W1"], packed["W2"], packed["W3"], packed["WH"],
              packed["BIAS"])
    flops = (2 * B * N * 2 * H * (C + 2 * H + H)   # three fused MLP matmuls
             + 2 * B * (B * N) * H                 # segment pooling matmul
             + 2 * B * H * H)                      # mu|logvar head
    bytes_accessed = (sum(int(x.size) * x.dtype.itemsize for x in inputs)
                      + B * H * 4)

    out = pl.pallas_call(
        kernel,
        out_shape=jax.ShapeDtypeStruct((B, H), jnp.float32),
        in_specs=[vmem() for _ in range(len(inputs))],
        out_specs=vmem(),
        cost_estimate=pl.CostEstimate(flops=int(flops), transcendentals=int(B * N),
                                      bytes_accessed=int(bytes_accessed)),
    )(*inputs)

    mu = out[:, :L]
    logvar = out[:, L:2 * L]
    z = mu  # eval mode: reparametrize(mu, logvar) == mu
    return z, mu, logvar, h


# ----------------------- reference (plain JAX, f32) --------------------------
def vgae_encode_ref(h, p):
    def mlp3(x, w1, b1, w2, b2, w3, b3):
        x = _lrelu(x @ w1 + b1)
        x = _lrelu(x @ w2 + b2)
        return x @ w3 + b3

    B = h.shape[0]
    outs_mu, outs_lv = [], []
    for b in range(B):
        hb = h[b]
        g = mlp3(hb, p["wg1"], p["bg1"], p["wg2"], p["bg2"], p["wg3"], p["bg3"])
        t = mlp3(hb, p["we1"], p["be1"], p["we2"], p["be2"], p["we3"], p["be3"])
        attn = jax.nn.softmax(g, axis=0)
        xg = jnp.sum(attn * t, axis=0, keepdims=True)
        mu = xg @ p["wmu"] + p["bmu"]
        lv = jnp.minimum(xg @ p["wsig"] + p["bsig"], MAX_LOGSTD)
        outs_mu.append(mu[0])
        outs_lv.append(lv[0])
    mu = jnp.stack(outs_mu)
    lv = jnp.stack(outs_lv)
    return mu, mu, lv  # z == mu in eval mode


# ----------------------- deterministic parameter init -----------------------
def init_params(key, C, L, hidden=HIDDEN):
    def linear(key, fan_in, fan_out):
        k1, k2 = jax.random.split(key)
        bound = 1.0 / jnp.sqrt(fan_in)
        w = jax.random.uniform(k1, (fan_in, fan_out), jnp.float32, -bound, bound)
        b = jax.random.uniform(k2, (1, fan_out), jnp.float32, -bound, bound)
        return w, b

    keys = jax.random.split(key, 8)
    p = {}
    p["wg1"], p["bg1"] = linear(keys[0], C, hidden)
    p["wg2"], p["bg2"] = linear(keys[1], hidden, hidden)
    p["wg3"], p["bg3"] = linear(keys[2], hidden, 1)
    p["we1"], p["be1"] = linear(keys[3], C, hidden)
    p["we2"], p["be2"] = linear(keys[4], hidden, hidden)
    p["we3"], p["be3"] = linear(keys[5], hidden, C)
    p["wmu"], p["bmu"] = linear(keys[6], C, L)
    p["wsig"], p["bsig"] = linear(keys[7], C, L)
    return p


if __name__ == "__main__":
    B, N, C, L = 2, 64, 32, 16  # graphs, nodes/graph, encoder.out_channels, latent_dims

    key = jax.random.PRNGKey(0)
    k_h, k_p = jax.random.split(key)
    # Synthetic encoder output (node embeddings); the GNN encoder is user-defined.
    h = jax.random.normal(k_h, (B, N, C), dtype=jnp.float32)
    params = init_params(k_p, C, L)
    packed = pack_vgae_params(params, C, L)   # pack once, outside the hot path

    encode = jax.jit(functools.partial(vgae_encode, latent_dims=L))
    z, mu, logvar, node_embedds = encode(h, packed)
    jax.block_until_ready((z, mu, logvar))

    z_ref, mu_ref, lv_ref = vgae_encode_ref(h, params)
    # Tolerance reflects bf16 weights/activations on the MXU (f32 reference);
    # the softmax normalizer uses an exact divide (no approx reciprocal).
    assert jnp.allclose(z, z_ref, atol=2e-2, rtol=2e-2)
    assert jnp.allclose(mu, mu_ref, atol=2e-2, rtol=2e-2)
    assert jnp.allclose(logvar, lv_ref, atol=2e-2, rtol=2e-2)

    print("KERNEL_OK")
</pallas_src>

<mosaic_0001>
module attributes {stable_mosaic.version = 11 : i64} {
  func.func @vgae_head_kernel(%arg0: memref<128x32xbf16, #tpu.memory_space<vmem>>, %arg1: memref<32x256xbf16, #tpu.memory_space<vmem>>, %arg2: memref<256x256xbf16, #tpu.memory_space<vmem>>, %arg3: memref<256x128xbf16, #tpu.memory_space<vmem>>, %arg4: memref<128x128xbf16, #tpu.memory_space<vmem>>, %arg5: memref<4x256xf32, #tpu.memory_space<vmem>>, %arg6: memref<2x128xf32, #tpu.memory_space<vmem>>) attributes {dimension_semantics = [], scalar_prefetch = 0 : i64, scratch_operands = 0 : i64, tpu.core_type = #tpu.core_type<tc>} {
    %c0 = arith.constant 0 : index
    %c0_0 = arith.constant 0 : index
    %0 = vector.load %arg0[%c0, %c0_0] : memref<128x32xbf16, #tpu.memory_space<vmem>>, vector<128x32xbf16>
    %c0_1 = arith.constant 0 : index
    %c0_2 = arith.constant 0 : index
    %1 = vector.load %arg5[%c0_1, %c0_2] : memref<4x256xf32, #tpu.memory_space<vmem>>, vector<4x256xf32>
    %2 = vector.extract_strided_slice %1 {offsets = [0, 0], sizes = [1, 256], strides = [1, 1]} : vector<4x256xf32> to vector<1x256xf32>
    %3 = vector.extract_strided_slice %1 {offsets = [1, 0], sizes = [1, 256], strides = [1, 1]} : vector<4x256xf32> to vector<1x256xf32>
    %4 = vector.extract_strided_slice %1 {offsets = [2, 0], sizes = [1, 128], strides = [1, 1]} : vector<4x256xf32> to vector<1x128xf32>
    %5 = vector.extract_strided_slice %1 {offsets = [3, 0], sizes = [1, 128], strides = [1, 1]} : vector<4x256xf32> to vector<1x128xf32>
    %c0_3 = arith.constant 0 : index
    %c0_4 = arith.constant 0 : index
    %6 = vector.load %arg1[%c0_3, %c0_4] : memref<32x256xbf16, #tpu.memory_space<vmem>>, vector<32x256xbf16>
    %cst = arith.constant dense<0.000000e+00> : vector<128x256xf32>
    %7 = tpu.matmul %0, %6, %cst {dimension_numbers = #tpu.dot_dimension_numbers<[1], [0], [0], [1], [0, 0, 1, 1], [], []>} : vector<128x32xbf16>, vector<32x256xbf16>, vector<128x256xf32> -> vector<128x256xf32>
    %8 = vector.broadcast %2 : vector<1x256xf32> to vector<128x256xf32>
    %9 = arith.addf %7, %8 : vector<128x256xf32>
    %cst_5 = arith.constant 0.000000e+00 : f32
    %10 = vector.broadcast %cst_5 : f32 to vector<128x256xf32>
    %11 = arith.cmpf ogt, %9, %10 : vector<128x256xf32>
    %cst_6 = arith.constant 0.00999999977 : f32
    %12 = vector.broadcast %cst_6 : f32 to vector<128x256xf32>
    %13 = arith.mulf %12, %9 : vector<128x256xf32>
    %14 = arith.select %11, %9, %13 : vector<128x256xi1>, vector<128x256xf32>
    %15 = arith.truncf %14 : vector<128x256xf32> to vector<128x256xbf16>
    %c0_7 = arith.constant 0 : index
    %c0_8 = arith.constant 0 : index
    %16 = vector.load %arg2[%c0_7, %c0_8] : memref<256x256xbf16, #tpu.memory_space<vmem>>, vector<256x256xbf16>
    %cst_9 = arith.constant dense<0.000000e+00> : vector<128x256xf32>
    %17 = tpu.matmul %15, %16, %cst_9 {dimension_numbers = #tpu.dot_dimension_numbers<[1], [0], [0], [1], [0, 0, 1, 1], [], []>} : vector<128x256xbf16>, vector<256x256xbf16>, vector<128x256xf32> -> vector<128x256xf32>
    %18 = vector.broadcast %3 : vector<1x256xf32> to vector<128x256xf32>
    %19 = arith.addf %17, %18 : vector<128x256xf32>
    %cst_10 = arith.constant 0.000000e+00 : f32
    %20 = vector.broadcast %cst_10 : f32 to vector<128x256xf32>
    %21 = arith.cmpf ogt, %19, %20 : vector<128x256xf32>
    %cst_11 = arith.constant 0.00999999977 : f32
    %22 = vector.broadcast %cst_11 : f32 to vector<128x256xf32>
    %23 = arith.mulf %22, %19 : vector<128x256xf32>
    %24 = arith.select %21, %19, %23 : vector<128x256xi1>, vector<128x256xf32>
    %25 = arith.truncf %24 : vector<128x256xf32> to vector<128x256xbf16>
    %c0_12 = arith.constant 0 : index
    %c0_13 = arith.constant 0 : index
    %26 = vector.load %arg3[%c0_12, %c0_13] : memref<256x128xbf16, #tpu.memory_space<vmem>>, vector<256x128xbf16>
    %cst_14 = arith.constant dense<0.000000e+00> : vector<128x128xf32>
    %27 = tpu.matmul %25, %26, %cst_14 {dimension_numbers = #tpu.dot_dimension_numbers<[1], [0], [0], [1], [0, 0, 1, 1], [], []>} : vector<128x256xbf16>, vector<256x128xbf16>, vector<128x128xf32> -> vector<128x128xf32>
    %28 = vector.broadcast %4 : vector<1x128xf32> to vector<128x128xf32>
    %29 = arith.addf %27, %28 : vector<128x128xf32>
    %30 = vector.extract_strided_slice %29 {offsets = [0, 127], sizes = [128, 1], strides = [1, 1]} : vector<128x128xf32> to vector<128x1xf32>
    %31 = tpu.iota {dimensions = array<i32: 0>} : vector<128x2xi32>
    %32 = tpu.iota {dimensions = array<i32: 1>} : vector<128x2xi32>
    %c64_i32 = arith.constant 64 : i32
    %33 = vector.broadcast %c64_i32 : i32 to vector<128x2xi32>
    %34 = arith.muli %32, %33 : vector<128x2xi32>
    %35 = arith.cmpi sge, %31, %34 : vector<128x2xi32>
    %c1_i32 = arith.constant 1 : i32
    %36 = vector.broadcast %c1_i32 : i32 to vector<128x2xi32>
    %37 = arith.addi %32, %36 : vector<128x2xi32>
    %c64_i32_15 = arith.constant 64 : i32
    %38 = vector.broadcast %c64_i32_15 : i32 to vector<128x2xi32>
    %39 = arith.muli %37, %38 : vector<128x2xi32>
    %40 = arith.cmpi slt, %31, %39 : vector<128x2xi32>
    %41 = arith.andi %35, %40 : vector<128x2xi1>
    %42 = arith.extui %41 : vector<128x2xi1> to vector<128x2xi32>
    %43 = arith.sitofp %42 : vector<128x2xi32> to vector<128x2xf32>
    %cst_16 = arith.constant -1.000000e+30 : f32
    %44 = vector.shape_cast %30 : vector<128x1xf32> to vector<128x1xf32>
    %45 = vector.broadcast %44 : vector<128x1xf32> to vector<128x2xf32>
    %46 = vector.broadcast %cst_16 : f32 to vector<128x2xf32>
    %47 = arith.select %41, %45, %46 : vector<128x2xi1>, vector<128x2xf32>
    %cst_17 = arith.constant dense<0xFF800000> : vector<2xf32>
    %48 = vector.multi_reduction <maximumf>, %47, %cst_17 [0] : vector<128x2xf32> to vector<2xf32>
    %49 = vector.shape_cast %48 : vector<2xf32> to vector<1x2xf32>
    %50 = vector.broadcast %49 : vector<1x2xf32> to vector<128x2xf32>
    %51 = arith.mulf %43, %50 : vector<128x2xf32>
    %cst_18 = arith.constant dense<0.000000e+00> : vector<128xf32>
    %52 = vector.multi_reduction <add>, %51, %cst_18 [1] : vector<128x2xf32> to vector<128xf32>
    %53 = vector.shape_cast %52 : vector<128xf32> to vector<128x1xf32>
    %54 = arith.subf %30, %53 : vector<128x1xf32>
    %55 = math.exp %54 : vector<128x1xf32>
    %56 = vector.broadcast %55 : vector<128x1xf32> to vector<128x128xf32>
    %57 = arith.mulf %56, %29 : vector<128x128xf32>
    %cst_19 = arith.constant dense<0.000000e+00> : vector<2x128xf32>
    %58 = tpu.matmul %43, %57, %cst_19 {dimension_numbers = #tpu.dot_dimension_numbers<[0], [0], [1], [1], [0, 1, 1, 1], [], []>} : vector<128x2xf32>, vector<128x128xf32>, vector<2x128xf32> -> vector<2x128xf32>
    %59 = vector.extract_strided_slice %58 {offsets = [0, 126], sizes = [2, 1], strides = [1, 1]} : vector<2x128xf32> to vector<2x1xf32>
    %60 = vector.broadcast %59 : vector<2x1xf32> to vector<2x128xf32>
    %61 = arith.divf %58, %60 : vector<2x128xf32>
    %62 = arith.truncf %61 : vector<2x128xf32> to vector<2x128xbf16>
    %c0_20 = arith.constant 0 : index
    %c0_21 = arith.constant 0 : index
    %63 = vector.load %arg4[%c0_20, %c0_21] : memref<128x128xbf16, #tpu.memory_space<vmem>>, vector<128x128xbf16>
    %cst_22 = arith.constant dense<0.000000e+00> : vector<2x128xf32>
    %64 = tpu.matmul %62, %63, %cst_22 {dimension_numbers = #tpu.dot_dimension_numbers<[1], [0], [0], [1], [0, 0, 1, 1], [], []>} : vector<2x128xbf16>, vector<128x128xbf16>, vector<2x128xf32> -> vector<2x128xf32>
    %65 = vector.broadcast %5 : vector<1x128xf32> to vector<2x128xf32>
    %66 = arith.addf %64, %65 : vector<2x128xf32>
    %67 = tpu.iota {dimensions = array<i32: 1>} : vector<2x128xi32>
    %c16_i32 = arith.constant 16 : i32
    %68 = vector.broadcast %c16_i32 : i32 to vector<2x128xi32>
    %69 = arith.cmpi sge, %67, %68 : vector<2x128xi32>
    %cst_23 = arith.constant 1.000000e+01 : f32
    %70 = vector.broadcast %cst_23 : f32 to vector<2x128xf32>
    %71 = arith.minimumf %66, %70 : vector<2x128xf32>
    %72 = arith.select %69, %71, %66 : vector<2x128xi1>, vector<2x128xf32>
    %c0_24 = arith.constant 0 : index
    %c0_25 = arith.constant 0 : index
    %73 = vector.load %arg6[%c0_24, %c0_25] : memref<2x128xf32, #tpu.memory_space<vmem>>, vector<2x128xf32>
    tpu.vector_store %arg6[%c0_24, %c0_25], %72 {strides = array<i32>} : memref<2x128xf32, #tpu.memory_space<vmem>>, vector<2x128xf32>,
    return
  }
}

</mosaic_0001>

<llo_original>
// kernel: vgae_encode.1
$region0: #{vgae_encode.1}
  #allocation0 [shape = 'u32[]', space=smem, size = 0x4, offset = 0x4, fixed_abs, tag = 'smem constant byte address 0x4 - core index']
  #allocation1 [shape = 'u32[144,128]{1,0:T(1,128)}', space=vmem, size = 0x12000, scoped, tag = 'internal scratch']
  %s0 = inlined_call_operand.vmem [shape: bf16[128,32], index: 0, kind: input, shape index: {}]
  %s1 = inlined_call_operand.hbm [shape: bf16[32,256], index: 1, kind: input, shape index: {}]
  %s2 = inlined_call_operand.hbm [shape: bf16[256,256], index: 2, kind: input, shape index: {}]
  %s3 = inlined_call_operand.vmem [shape: bf16[256,128], index: 3, kind: input, shape index: {}]
  %s4 = inlined_call_operand.vmem [shape: bf16[128,128], index: 4, kind: input, shape index: {}]
  %s5 = inlined_call_operand.hbm [shape: f32[4,256], index: 5, kind: input, shape index: {}]
  %s6 = inlined_call_operand.vmem [shape: f32[2,128], index: 6, kind: output, shape index: {}]
  %s7 = sld [smem:[#allocation0]]
  $region46: #{vgae_encode.1} parent=0
    _
  %s9 = ssub.s32 1, %s7
  %s10 = scalar_select 0, %s9, %s7
  $region1: #{vgae_encode.1} parent=0
    #allocation2 [shape = 'u8[16384]{0}', space=vmem, size = 0x4000, scoped, tag = 'input window, operand 1, single buffered']
    #allocation3 [shape = 's32[1]{0}', space=sflag, size = 0x4, scoped, tag = 'scoped memory for vgae_encode.1']
    #allocation4 [shape = 'u8[131072]{0}', space=vmem, size = 0x20000, scoped, tag = 'input window, operand 2, single buffered']
    #allocation5 [shape = 's32[1]{0}', space=sflag, size = 0x4, scoped, tag = 'scoped memory for vgae_encode.1']
    #allocation6 [shape = 'u8[4096]{0}', space=vmem, size = 0x1000, scoped, tag = 'input window, operand 5, single buffered']
    %11 = vsyncpa [#allocation3], 0
    %12 = vsyncpa [#allocation5], 0
    // Predicated region
    $region2: #{vgae_encode.1} parent=1 // pred_check
      _
    $region3: #{vgae_encode.1} parent=1 // pred_check_branch
      %14 = sbr.rel (0) target = $region5
    $region4: #{vgae_encode.1} parent=1 // pred_region
      _
    $region5: #{vgae_encode.1} parent=1 // pred_fallthru
      _
    // Predicated region
    $region6: #{vgae_encode.1} parent=1 // pred_check
      _
    $region7: #{vgae_encode.1} parent=1 // pred_check_branch
      %16 = sbr.rel (0) target = $region9
    $region8: #{vgae_encode.1} parent=1 // pred_region
      %s18 = ssub.s32 512, 512
      %19 = vsyncadd [#allocation3], %s18
      %s20 = sshll.u32 [#allocation2], 4
      %s21 = int_to_ptr.vmem [resolvable:$true] %s20
      %26 = dma.hbm_to_vmem [thread:$0]  %s1, 512, %s21, [#allocation3], 128, 128, 8
    $region9: #{vgae_encode.1} parent=1 // pred_fallthru
      _
    // Predicated region
    $region10: #{vgae_encode.1} parent=1 // pred_check
      _
    $region11: #{vgae_encode.1} parent=1 // pred_check_branch
      %28 = sbr.rel (0) target = $region13
    $region12: #{vgae_encode.1} parent=1 // pred_region
      %s30 = ssub.s32 4096, 4096
      %31 = vsyncadd [#allocation5], %s30
      %s32 = sshll.u32 [#allocation4], 4
      %s33 = int_to_ptr.vmem [resolvable:$true] %s32
      %38 = dma.hbm_to_vmem [thread:$0]  %s2, 4096, %s33, [#allocation5], 128, 128, 8
    $region13: #{vgae_encode.1} parent=1 // pred_fallthru
      _
    // Predicated region
    $region14: #{vgae_encode.1} parent=1 // pred_check
      _
    $region15: #{vgae_encode.1} parent=1 // pred_check_branch
      %40 = sbr.rel (0) target = $region17
    $region16: #{vgae_encode.1} parent=1 // pred_region
      _
    $region17: #{vgae_encode.1} parent=1 // pred_fallthru
      _
    // Predicated region
    $region18: #{vgae_encode.1} parent=1 // pred_check
      _
    $region19: #{vgae_encode.1} parent=1 // pred_check_branch
      %42 = sbr.rel (0) target = $region21
    $region20: #{vgae_encode.1} parent=1 // pred_region
      _
    $region21: #{vgae_encode.1} parent=1 // pred_fallthru
      _
    // Predicated region
    $region22: #{vgae_encode.1} parent=1 // pred_check
      _
    $region23: #{vgae_encode.1} parent=1 // pred_check_branch
      %44 = sbr.rel (0) target = $region25
    $region24: #{vgae_encode.1} parent=1 // pred_region
      %s46 = ssub.s32 128, 128
      %47 = vsyncadd [#allocation5], %s46
      %s49 = sshll.u32 [#allocation6], 4
      %s50 = int_to_ptr.vmem [resolvable:$true] %s49
      %52 = dma.hbm_to_vmem [thread:$0]  %s5, 128, %s50, [#allocation5]
    $region25: #{vgae_encode.1} parent=1 // pred_fallthru
      _
    // Predicated region
    $region26: #{vgae_encode.1} parent=1 // pred_check
      _
    $region27: #{vgae_encode.1} parent=1 // pred_check_branch
      %54 = sbr.rel (0) target = $region29
    $region28: #{vgae_encode.1} parent=1 // pred_region
      %55 = dma.done [#allocation3], 512
    $region29: #{vgae_encode.1} parent=1 // pred_fallthru
      _
    // Predicated region
    $region30: #{vgae_encode.1} parent=1 // pred_check
      _
    $region31: #{vgae_encode.1} parent=1 // pred_check_branch
      %57 = sbr.rel (0) target = $region33
    $region32: #{vgae_encode.1} parent=1 // pred_region
      %58 = dma.done [#allocation5], 4096
    $region33: #{vgae_encode.1} parent=1 // pred_fallthru
      _
    // Predicated region
    $region34: #{vgae_encode.1} parent=1 // pred_check
      _
    $region35: #{vgae_encode.1} parent=1 // pred_check_branch
      %60 = sbr.rel (0) target = $region37
    $region36: #{vgae_encode.1} parent=1 // pred_region
      %61 = dma.done [#allocation5], 128
    $region37: #{vgae_encode.1} parent=1 // pred_fallthru
      _
    %v63 = vld [vmem:[%s0] sm:$0xf]
    %v64 = vld [vmem:[%s0 + $0x4] sm:$0xf]
    %v65 = vld [vmem:[%s0 + $0x8] sm:$0xf]
    %v66 = vld [vmem:[%s0 + $0xc] sm:$0xf]
    %v67 = vld [vmem:[%s0 + $0x10] sm:$0xf]
    %v68 = vld [vmem:[%s0 + $0x14] sm:$0xf]
    %v69 = vld [vmem:[%s0 + $0x18] sm:$0xf]
    %v70 = vld [vmem:[%s0 + $0x1c] sm:$0xf]
    %v71 = vld [vmem:[%s0 + $0x20] sm:$0xf]
    %v72 = vld [vmem:[%s0 + $0x24] sm:$0xf]
    %v73 = vld [vmem:[%s0 + $0x28] sm:$0xf]
    %v74 = vld [vmem:[%s0 + $0x2c] sm:$0xf]
    %v75 = vld [vmem:[%s0 + $0x30] sm:$0xf]
    %v76 = vld [vmem:[%s0 + $0x34] sm:$0xf]
    %v77 = vld [vmem:[%s0 + $0x38] sm:$0xf]
    %v78 = vld [vmem:[%s0 + $0x3c] sm:$0xf]
    %v79 = vld [vmem:[#allocation6] sm:$0xff]
    %v80 = vld [vmem:[#allocation2] sm:$0xff]
    %v81 = vld [vmem:[#allocation2 + $0x8] sm:$0xff]
    %v82 = vld [vmem:[#allocation2 + $0x10] sm:$0xff]
    %v83 = vld [vmem:[#allocation2 + $0x18] sm:$0xff]
    %v85 = vlaneseq
    %v86 = vshrl.u32 %v85, 7
    %v87 = vsub.s32 0, %v86
    %v88 = vrot.slane %v79, %v87
    %v89 = vlaneseq
    %v90 = vshrl.u32 %v89, 7
    %v91 = vsub.s32 4, %v90
    %v92 = vrot.slane %v79, %v91
    %v95 = vlaneseq
    %v96 = vshrl.u32 %v95, 7
    %v97 = vsub.s32 0, %v96
    %v98 = vrot.slane %v88, %v97
    %v99 = vlaneseq
    %v100 = vshrl.u32 %v99, 7
    %v101 = vsub.s32 0, %v100
    %v102 = vrot.slane %v92, %v101
    %v119 = vunpack.c.l.b16 %v63
    %v120 = vunpack.c.l.b16 %v64
    %v121 = vunpack.c.l.b16 %v65
    %v122 = vunpack.c.l.b16 %v66
    %v123 = vunpack.c.l.b16 %v67
    %v124 = vunpack.c.l.b16 %v68
    %v125 = vunpack.c.l.b16 %v69
    %v126 = vunpack.c.l.b16 %v70
    %v127 = vunpack.c.l.b16 %v71
    %v128 = vunpack.c.l.b16 %v72
    %v129 = vunpack.c.l.b16 %v73
    %v130 = vunpack.c.l.b16 %v74
    %v131 = vunpack.c.l.b16 %v75
    %v132 = vunpack.c.l.b16 %v76
    %v133 = vunpack.c.l.b16 %v77
    %v134 = vunpack.c.l.b16 %v78
    %v135 = vpack.c.b16 %v120, %v119
    %v136 = vpack.c.b16 %v122, %v121
    %v137 = vpack.c.b16 %v124, %v123
    %v138 = vpack.c.b16 %v126, %v125
    %v139 = vpack.c.b16 %v128, %v127
    %v140 = vpack.c.b16 %v130, %v129
    %v141 = vpack.c.b16 %v132, %v131
    %v142 = vpack.c.b16 %v134, %v133
    %v147 = vunpack.c.l.b16 %v80
    %v148 = vunpack.c.h.b16 %v80
    %v149 = vunpack.c.l.b16 %v81
    %v150 = vunpack.c.h.b16 %v81
    %v151 = vunpack.c.l.b16 %v82
    %v152 = vunpack.c.h.b16 %v82
    %v153 = vunpack.c.l.b16 %v83
    %v154 = vunpack.c.h.b16 %v83
    %v155 = vpack.c.b16 %v149, %v147
    %v156 = vpack.c.b16 %v150, %v148
    %v157 = vpack.c.b16 %v153, %v151
    %v158 = vpack.c.b16 %v154, %v152
    %vm163 = vcmask 261120
    %v165 = vsel %vm163, %v135, 0
    %v168 = vsel %vm163, %v136, 0
    %v171 = vsel %vm163, %v137, 0
    %v174 = vsel %vm163, %v138, 0
    %v177 = vsel %vm163, %v139, 0
    %v180 = vsel %vm163, %v140, 0
    %v183 = vsel %vm163, %v141, 0
    %v186 = vsel %vm163, %v142, 0
    %188 = vmatprep.subr.bf16.mxu0 0
    %189 = vmatpush1.bf16.msra.mxu0 0
    %190 = vmatprep.subr.bf16.mxu0 0
    %191 = vmatpush1.bf16.msra.mxu0 0
    %192 = vmatprep.subr.bf16.mxu0 0
    %193 = vmatpush1.bf16.msra.mxu0 0
    %194 = vmatprep.subr.bf16.mxu0 0
    %195 = vmatpush1.bf16.msra.mxu0 0
    %196 = vmatprep.subr.bf16.mxu0 0
    %197 = vmatpush1.bf16.msra.mxu0 0
    %198 = vmatprep.subr.bf16.mxu0 0
    %199 = vmatpush1.bf16.msra.mxu0 0
    %200 = vmatprep.subr.bf16.mxu0 %v158
    %201 = vmatpush1.bf16.msra.mxu0 %v157
    %202 = vmatprep.subr.bf16.mxu0 %v156
    %203 = vmatpush1.bf16.msra.mxu0 %v155
    %204 = vmatprep.subr.bf16.mxu0 0
    %205 = vmatpush2.bf16.msra.mxu0 0
    %206 = vmatprep.subr.bf16.mxu0 0
    %207 = vmatpush2.bf16.msra.mxu0 0
    %208 = vmatprep.subr.bf16.mxu0 0
    %209 = vmatpush2.bf16.msra.mxu0 0
    %210 = vmatprep.subr.bf16.mxu0 0
    %211 = vmatpush2.bf16.msra.mxu0 0
    %212 = vmatprep.subr.bf16.mxu0 0
    %213 = vmatpush2.bf16.msra.mxu0 0
    %214 = vmatprep.subr.bf16.mxu0 0
    %215 = vmatpush2.bf16.msra.mxu0 0
    %216 = vmatprep.subr.bf16.mxu0 0
    %217 = vmatpush2.bf16.msra.mxu0 0
    %218 = vmatprep.subr.bf16.mxu0 0
    %219 = vmatpush2.bf16.msra.mxu0 0
    %220 = vmatprep.mubr.bf16.mxu0 0
    %221 = vmatmul.mubr.bf16.gmra.mxu0 %v165
    %v222 = vpop.f32.mrf.mxu0
    %v223 = vadd.f32 %v98, %v222
    %v224 = vpop.f32.mrf.mxu0
    %v225 = vadd.f32 %v102, %v224
    %v226 = vpop.f32.mrf.mxu0
    %v227 = vadd.f32 %v98, %v226
    %v228 = vpop.f32.mrf.mxu0
    %v229 = vadd.f32 %v102, %v228
    %230 = vmatprep.mubr.bf16.mxu0 0
    %231 = vmatmul.mubr.bf16.gmra.mxu0 %v168
    %v232 = vpop.f32.mrf.mxu0
    %v233 = vadd.f32 %v98, %v232
    %v234 = vpop.f32.mrf.mxu0
    %v235 = vadd.f32 %v102, %v234
    %v236 = vpop.f32.mrf.mxu0
    %v237 = vadd.f32 %v98, %v236
    %v238 = vpop.f32.mrf.mxu0
    %v239 = vadd.f32 %v102, %v238
    %240 = vmatprep.mubr.bf16.mxu0 0
    %241 = vmatmul.mubr.bf16.gmra.mxu0 %v171
    %v242 = vpop.f32.mrf.mxu0
    %v243 = vadd.f32 %v98, %v242
    %v244 = vpop.f32.mrf.mxu0
    %v245 = vadd.f32 %v102, %v244
    %v246 = vpop.f32.mrf.mxu0
    %v247 = vadd.f32 %v98, %v246
    %v248 = vpop.f32.mrf.mxu0
    %v249 = vadd.f32 %v102, %v248
    %250 = vmatprep.mubr.bf16.mxu0 0
    %251 = vmatmul.mubr.bf16.gmra.mxu0 %v174
    %v252 = vpop.f32.mrf.mxu0
    %v253 = vadd.f32 %v98, %v252
    %v254 = vpop.f32.mrf.mxu0
    %v255 = vadd.f32 %v102, %v254
    %v256 = vpop.f32.mrf.mxu0
    %v257 = vadd.f32 %v98, %v256
    %v258 = vpop.f32.mrf.mxu0
    %v259 = vadd.f32 %v102, %v258
    %260 = vmatprep.mubr.bf16.mxu0 0
    %261 = vmatmul.mubr.bf16.gmra.mxu0 %v177
    %v262 = vpop.f32.mrf.mxu0
    %v263 = vadd.f32 %v98, %v262
    %v264 = vpop.f32.mrf.mxu0
    %v265 = vadd.f32 %v102, %v264
    %v266 = vpop.f32.mrf.mxu0
    %v267 = vadd.f32 %v98, %v266
    %v268 = vpop.f32.mrf.mxu0
    %v269 = vadd.f32 %v102, %v268
    %270 = vmatprep.mubr.bf16.mxu0 0
    %271 = vmatmul.mubr.bf16.gmra.mxu0 %v180
    %v272 = vpop.f32.mrf.mxu0
    %v273 = vadd.f32 %v98, %v272
    %v274 = vpop.f32.mrf.mxu0
    %v275 = vadd.f32 %v102, %v274
    %v276 = vpop.f32.mrf.mxu0
    %v277 = vadd.f32 %v98, %v276
    %v278 = vpop.f32.mrf.mxu0
    %v279 = vadd.f32 %v102, %v278
    %280 = vmatprep.mubr.bf16.mxu0 0
    %281 = vmatmul.mubr.bf16.gmra.mxu0 %v183
    %v282 = vpop.f32.mrf.mxu0
    %v283 = vadd.f32 %v98, %v282
    %v284 = vpop.f32.mrf.mxu0
    %v285 = vadd.f32 %v102, %v284
    %v286 = vpop.f32.mrf.mxu0
    %v287 = vadd.f32 %v98, %v286
    %v288 = vpop.f32.mrf.mxu0
    %v289 = vadd.f32 %v102, %v288
    %290 = vmatprep.mubr.bf16.mxu0 0
    %291 = vmatmul.mubr.bf16.gmra.mxu0 %v186
    %v292 = vpop.f32.mrf.mxu0
    %v293 = vadd.f32 %v98, %v292
    %v294 = vpop.f32.mrf.mxu0
    %v295 = vadd.f32 %v102, %v294
    %v296 = vpop.f32.mrf.mxu0
    %v297 = vadd.f32 %v98, %v296
    %v298 = vpop.f32.mrf.mxu0
    %v299 = vadd.f32 %v102, %v298
    %300 = vdwg.mxu0
    %vm301 = vcmp.gt.f32.partialorder %v223, 0.0
    %vm302 = vcmp.gt.f32.partialorder %v225, 0.0
    %vm303 = vcmp.gt.f32.partialorder %v227, 0.0
    %vm304 = vcmp.gt.f32.partialorder %v229, 0.0
    %vm305 = vcmp.gt.f32.partialorder %v233, 0.0
    %vm306 = vcmp.gt.f32.partialorder %v235, 0.0
    %vm307 = vcmp.gt.f32.partialorder %v237, 0.0
    %vm308 = vcmp.gt.f32.partialorder %v239, 0.0
    %vm309 = vcmp.gt.f32.partialorder %v243, 0.0
    %vm310 = vcmp.gt.f32.partialorder %v245, 0.0
    %vm311 = vcmp.gt.f32.partialorder %v247, 0.0
    %vm312 = vcmp.gt.f32.partialorder %v249, 0.0
    %vm313 = vcmp.gt.f32.partialorder %v253, 0.0
    %vm314 = vcmp.gt.f32.partialorder %v255, 0.0
    %vm315 = vcmp.gt.f32.partialorder %v257, 0.0
    %vm316 = vcmp.gt.f32.partialorder %v259, 0.0
    %vm317 = vcmp.gt.f32.partialorder %v263, 0.0
    %vm318 = vcmp.gt.f32.partialorder %v265, 0.0
    %vm319 = vcmp.gt.f32.partialorder %v267, 0.0
    %vm320 = vcmp.gt.f32.partialorder %v269, 0.0
    %vm321 = vcmp.gt.f32.partialorder %v273, 0.0
    %vm322 = vcmp.gt.f32.partialorder %v275, 0.0
    %vm323 = vcmp.gt.f32.partialorder %v277, 0.0
    %vm324 = vcmp.gt.f32.partialorder %v279, 0.0
    %vm325 = vcmp.gt.f32.partialorder %v283, 0.0
    %vm326 = vcmp.gt.f32.partialorder %v285, 0.0
    %vm327 = vcmp.gt.f32.partialorder %v287, 0.0
    %vm328 = vcmp.gt.f32.partialorder %v289, 0.0
    %vm329 = vcmp.gt.f32.partialorder %v293, 0.0
    %vm330 = vcmp.gt.f32.partialorder %v295, 0.0
    %vm331 = vcmp.gt.f32.partialorder %v297, 0.0
    %vm332 = vcmp.gt.f32.partialorder %v299, 0.0
    %v333 = vmul.f32 %v223, 0.01
    %v334 = vmul.f32 %v225, 0.01
    %v335 = vmul.f32 %v227, 0.01
    %v336 = vmul.f32 %v229, 0.01
    %v337 = vmul.f32 %v233, 0.01
    %v338 = vmul.f32 %v235, 0.01
    %v339 = vmul.f32 %v237, 0.01
    %v340 = vmul.f32 %v239, 0.01
    %v341 = vmul.f32 %v243, 0.01
    %v342 = vmul.f32 %v245, 0.01
    %v343 = vmul.f32 %v247, 0.01
    %v344 = vmul.f32 %v249, 0.01
    %v345 = vmul.f32 %v253, 0.01
    %v346 = vmul.f32 %v255, 0.01
    %v347 = vmul.f32 %v257, 0.01
    %v348 = vmul.f32 %v259, 0.01
    %v349 = vmul.f32 %v263, 0.01
    %v350 = vmul.f32 %v265, 0.01
    %v351 = vmul.f32 %v267, 0.01
    %v352 = vmul.f32 %v269, 0.01
    %v353 = vmul.f32 %v273, 0.01
    %v354 = vmul.f32 %v275, 0.01
    %v355 = vmul.f32 %v277, 0.01
    %v356 = vmul.f32 %v279, 0.01
    %v357 = vmul.f32 %v283, 0.01
    %v358 = vmul.f32 %v285, 0.01
    %v359 = vmul.f32 %v287, 0.01
    %v360 = vmul.f32 %v289, 0.01
    %v361 = vmul.f32 %v293, 0.01
    %v362 = vmul.f32 %v295, 0.01
    %v363 = vmul.f32 %v297, 0.01
    %v364 = vmul.f32 %v299, 0.01
    %v365 = vsel %vm301, %v223, %v333
    %v366 = vsel %vm302, %v225, %v334
    %v367 = vsel %vm303, %v227, %v335
    %v368 = vsel %vm304, %v229, %v336
    %v369 = vsel %vm305, %v233, %v337
    %v370 = vsel %vm306, %v235, %v338
    %v371 = vsel %vm307, %v237, %v339
    %v372 = vsel %vm308, %v239, %v340
    %v373 = vsel %vm309, %v243, %v341
    %v374 = vsel %vm310, %v245, %v342
    %v375 = vsel %vm311, %v247, %v343
    %v376 = vsel %vm312, %v249, %v344
    %v377 = vsel %vm313, %v253, %v345
    %v378 = vsel %vm314, %v255, %v346
    %v379 = vsel %vm315, %v257, %v347
    %v380 = vsel %vm316, %v259, %v348
    %v381 = vsel %vm317, %v263, %v349
    %v382 = vsel %vm318, %v265, %v350
    %v383 = vsel %vm319, %v267, %v351
    %v384 = vsel %vm320, %v269, %v352
    %v385 = vsel %vm321, %v273, %v353
    %v386 = vsel %vm322, %v275, %v354
    %v387 = vsel %vm323, %v277, %v355
    %v388 = vsel %vm324, %v279, %v356
    %v389 = vsel %vm325, %v283, %v357
    %v390 = vsel %vm326, %v285, %v358
    %v391 = vsel %vm327, %v287, %v359
    %v392 = vsel %vm328, %v289, %v360
    %v393 = vsel %vm329, %v293, %v361
    %v394 = vsel %vm330, %v295, %v362
    %v395 = vsel %vm331, %v297, %v363
    %v396 = vsel %vm332, %v299, %v364
    %v397 = vpack.c.bf16 %v367, %v365
    %v398 = vpack.c.bf16 %v368, %v366
    %v399 = vpack.c.bf16 %v371, %v369
    %v400 = vpack.c.bf16 %v372, %v370
    %v401 = vpack.c.bf16 %v375, %v373
    %v402 = vpack.c.bf16 %v376, %v374
    %v403 = vpack.c.bf16 %v379, %v377
    %v404 = vpack.c.bf16 %v380, %v378
    %v405 = vpack.c.bf16 %v383, %v381
    %v406 = vpack.c.bf16 %v384, %v382
    %v407 = vpack.c.bf16 %v387, %v385
    %v408 = vpack.c.bf16 %v388, %v386
    %v409 = vpack.c.bf16 %v391, %v389
    %v410 = vpack.c.bf16 %v392, %v390
    %v411 = vpack.c.bf16 %v395, %v393
    %v412 = vpack.c.bf16 %v396, %v394
    %v413 = vld [vmem:[#allocation4] sm:$0xff]
    %v414 = vld [vmem:[#allocation4 + $0x8] sm:$0xff]
    %v415 = vld [vmem:[#allocation4 + $0x10] sm:$0xff]
    %v416 = vld [vmem:[#allocation4 + $0x18] sm:$0xff]
    %v417 = vld [vmem:[#allocation4 + $0x20] sm:$0xff]
    %v418 = vld [vmem:[#allocation4 + $0x28] sm:$0xff]
    %v419 = vld [vmem:[#allocation4 + $0x30] sm:$0xff]
    %v420 = vld [vmem:[#allocation4 + $0x38] sm:$0xff]
    %v421 = vld [vmem:[#allocation4 + $0x40] sm:$0xff]
    %v422 = vld [vmem:[#allocation4 + $0x48] sm:$0xff]
    %v423 = vld [vmem:[#allocation4 + $0x50] sm:$0xff]
    %v424 = vld [vmem:[#allocation4 + $0x58] sm:$0xff]
    %v425 = vld [vmem:[#allocation4 + $0x60] sm:$0xff]
    %v426 = vld [vmem:[#allocation4 + $0x68] sm:$0xff]
    %v427 = vld [vmem:[#allocation4 + $0x70] sm:$0xff]
    %v428 = vld [vmem:[#allocation4 + $0x78] sm:$0xff]
    %v429 = vld [vmem:[#allocation4 + $0x80] sm:$0xff]
    %v430 = vld [vmem:[#allocation4 + $0x88] sm:$0xff]
    %v431 = vld [vmem:[#allocation4 + $0x90] sm:$0xff]
    %v432 = vld [vmem:[#allocation4 + $0x98] sm:$0xff]
    %v433 = vld [vmem:[#allocation4 + $0xa0] sm:$0xff]
    %v434 = vld [vmem:[#allocation4 + $0xa8] sm:$0xff]
    %v435 = vld [vmem:[#allocation4 + $0xb0] sm:$0xff]
    %v436 = vld [vmem:[#allocation4 + $0xb8] sm:$0xff]
    %v437 = vld [vmem:[#allocation4 + $0xc0] sm:$0xff]
    %v438 = vld [vmem:[#allocation4 + $0xc8] sm:$0xff]
    %v439 = vld [vmem:[#allocation4 + $0xd0] sm:$0xff]
    %v440 = vld [vmem:[#allocation4 + $0xd8] sm:$0xff]
    %v441 = vld [vmem:[#allocation4 + $0xe0] sm:$0xff]
    %v442 = vld [vmem:[#allocation4 + $0xe8] sm:$0xff]
    %v443 = vld [vmem:[#allocation4 + $0xf0] sm:$0xff]
    %v444 = vld [vmem:[#allocation4 + $0xf8] sm:$0xff]
    %v445 = vlaneseq
    %v446 = vshrl.u32 %v445, 7
    %v447 = vsub.s32 1, %v446
    %v448 = vrot.slane %v79, %v447
    %v449 = vlaneseq
    %v450 = vshrl.u32 %v449, 7
    %v451 = vsub.s32 5, %v450
    %v452 = vrot.slane %v79, %v451
    %v455 = vlaneseq
    %v456 = vshrl.u32 %v455, 7
    %v457 = vsub.s32 1, %v456
    %v458 = vrot.slane %v448, %v457
    %v459 = vlaneseq
    %v460 = vshrl.u32 %v459, 7
    %v461 = vsub.s32 1, %v460
    %v462 = vrot.slane %v452, %v461
    %v495 = vunpack.c.l.b16 %v413
    %v496 = vunpack.c.h.b16 %v413
    %v497 = vunpack.c.l.b16 %v414
    %v498 = vunpack.c.h.b16 %v414
    %v499 = vunpack.c.l.b16 %v415
    %v500 = vunpack.c.h.b16 %v415
    %v501 = vunpack.c.l.b16 %v416
    %v502 = vunpack.c.h.b16 %v416
    %v503 = vunpack.c.l.b16 %v417
    %v504 = vunpack.c.h.b16 %v417
    %v505 = vunpack.c.l.b16 %v418
    %v506 = vunpack.c.h.b16 %v418
    %v507 = vunpack.c.l.b16 %v419
    %v508 = vunpack.c.h.b16 %v419
    %v509 = vunpack.c.l.b16 %v420
    %v510 = vunpack.c.h.b16 %v420
    %v511 = vunpack.c.l.b16 %v421
    %v512 = vunpack.c.h.b16 %v421
    %v513 = vunpack.c.l.b16 %v422
    %v514 = vunpack.c.h.b16 %v422
    %v515 = vunpack.c.l.b16 %v423
    %v516 = vunpack.c.h.b16 %v423
    %v517 = vunpack.c.l.b16 %v424
    %v518 = vunpack.c.h.b16 %v424
    %v519 = vunpack.c.l.b16 %v425
    %v520 = vunpack.c.h.b16 %v425
    %v521 = vunpack.c.l.b16 %v426
    %v522 = vunpack.c.h.b16 %v426
    %v523 = vunpack.c.l.b16 %v427
    %v524 = vunpack.c.h.b16 %v427
    %v525 = vunpack.c.l.b16 %v428
    %v526 = vunpack.c.h.b16 %v428
    %v527 = vunpack.c.l.b16 %v429
    %v528 = vunpack.c.h.b16 %v429
    %v529 = vunpack.c.l.b16 %v430
    %v530 = vunpack.c.h.b16 %v430
    %v531 = vunpack.c.l.b16 %v431
    %v532 = vunpack.c.h.b16 %v431
    %v533 = vunpack.c.l.b16 %v432
    %v534 = vunpack.c.h.b16 %v432
    %v535 = vunpack.c.l.b16 %v433
    %v536 = vunpack.c.h.b16 %v433
    %v537 = vunpack.c.l.b16 %v434
    %v538 = vunpack.c.h.b16 %v434
    %v539 = vunpack.c.l.b16 %v435
    %v540 = vunpack.c.h.b16 %v435
    %v541 = vunpack.c.l.b16 %v436
    %v542 = vunpack.c.h.b16 %v436
    %v543 = vunpack.c.l.b16 %v437
    %v544 = vunpack.c.h.b16 %v437
    %v545 = vunpack.c.l.b16 %v438
    %v546 = vunpack.c.h.b16 %v438
    %v547 = vunpack.c.l.b16 %v439
    %v548 = vunpack.c.h.b16 %v439
    %v549 = vunpack.c.l.b16 %v440
    %v550 = vunpack.c.h.b16 %v440
    %v551 = vunpack.c.l.b16 %v441
    %v552 = vunpack.c.h.b16 %v441
    %v553 = vunpack.c.l.b16 %v442
    %v554 = vunpack.c.h.b16 %v442
    %v555 = vunpack.c.l.b16 %v443
    %v556 = vunpack.c.h.b16 %v443
    %v557 = vunpack.c.l.b16 %v444
    %v558 = vunpack.c.h.b16 %v444
    %v559 = vpack.c.b16 %v497, %v495
    %v560 = vpack.c.b16 %v498, %v496
    %v561 = vpack.c.b16 %v501, %v499
    %v562 = vpack.c.b16 %v502, %v500
    %v563 = vpack.c.b16 %v505, %v503
    %v564 = vpack.c.b16 %v506, %v504
    %v565 = vpack.c.b16 %v509, %v507
    %v566 = vpack.c.b16 %v510, %v508
    %v567 = vpack.c.b16 %v513, %v511
    %v568 = vpack.c.b16 %v514, %v512
    %v569 = vpack.c.b16 %v517, %v515
    %v570 = vpack.c.b16 %v518, %v516
    %v571 = vpack.c.b16 %v521, %v519
    %v572 = vpack.c.b16 %v522, %v520
    %v573 = vpack.c.b16 %v525, %v523
    %v574 = vpack.c.b16 %v526, %v524
    %v575 = vpack.c.b16 %v529, %v527
    %v576 = vpack.c.b16 %v530, %v528
    %v577 = vpack.c.b16 %v533, %v531
    %v578 = vpack.c.b16 %v534, %v532
    %v579 = vpack.c.b16 %v537, %v535
    %v580 = vpack.c.b16 %v538, %v536
    %v581 = vpack.c.b16 %v541, %v539
    %v582 = vpack.c.b16 %v542, %v540
    %v583 = vpack.c.b16 %v545, %v543
    %v584 = vpack.c.b16 %v546, %v544
    %v585 = vpack.c.b16 %v549, %v547
    %v586 = vpack.c.b16 %v550, %v548
    %v587 = vpack.c.b16 %v553, %v551
    %v588 = vpack.c.b16 %v554, %v552
    %v589 = vpack.c.b16 %v557, %v555
    %v590 = vpack.c.b16 %v558, %v556
    %623 = vmatprep.subr.bf16.mxu0 %v574
    %624 = vmatpush1.bf16.msra.mxu0 %v573
    %625 = vmatprep.subr.bf16.mxu0 %v572
    %626 = vmatpush1.bf16.msra.mxu0 %v571
    %627 = vmatprep.subr.bf16.mxu0 %v570
    %628 = vmatpush1.bf16.msra.mxu0 %v569
    %629 = vmatprep.subr.bf16.mxu0 %v568
    %630 = vmatpush1.bf16.msra.mxu0 %v567
    %631 = vmatprep.subr.bf16.mxu0 %v566
    %632 = vmatpush1.bf16.msra.mxu0 %v565
    %633 = vmatprep.subr.bf16.mxu0 %v564
    %634 = vmatpush1.bf16.msra.mxu0 %v563
    %635 = vmatprep.subr.bf16.mxu0 %v562
    %636 = vmatpush1.bf16.msra.mxu0 %v561
    %637 = vmatprep.subr.bf16.mxu0 %v560
    %638 = vmatpush1.bf16.msra.mxu0 %v559
    %639 = vmatprep.subr.bf16.mxu0 %v590
    %640 = vmatpush2.bf16.msra.mxu0 %v589
    %641 = vmatprep.subr.bf16.mxu0 %v588
    %642 = vmatpush2.bf16.msra.mxu0 %v587
    %643 = vmatprep.subr.bf16.mxu0 %v586
    %644 = vmatpush2.bf16.msra.mxu0 %v585
    %645 = vmatprep.subr.bf16.mxu0 %v584
    %646 = vmatpush2.bf16.msra.mxu0 %v583
    %647 = vmatprep.subr.bf16.mxu0 %v582
    %648 = vmatpush2.bf16.msra.mxu0 %v581
    %649 = vmatprep.subr.bf16.mxu0 %v580
    %650 = vmatpush2.bf16.msra.mxu0 %v579
    %651 = vmatprep.subr.bf16.mxu0 %v578
    %652 = vmatpush2.bf16.msra.mxu0 %v577
    %653 = vmatprep.subr.bf16.mxu0 %v576
    %654 = vmatpush2.bf16.msra.mxu0 %v575
    %655 = vmatprep.mubr.bf16.mxu0 %v398
    %656 = vmatmul.mubr.bf16.gmra.mxu0 %v397
    %v657 = vpop.f32.mrf.mxu0
    %v658 = vadd.f32 %v458, %v657
    %v659 = vpop.f32.mrf.mxu0
    %v660 = vadd.f32 %v462, %v659
    %v661 = vpop.f32.mrf.mxu0
    %v662 = vadd.f32 %v458, %v661
    %v663 = vpop.f32.mrf.mxu0
    %v664 = vadd.f32 %v462, %v663
    %665 = vmatprep.mubr.bf16.mxu0 %v400
    %666 = vmatmul.mubr.bf16.gmra.mxu0 %v399
    %v667 = vpop.f32.mrf.mxu0
    %v668 = vadd.f32 %v458, %v667
    %v669 = vpop.f32.mrf.mxu0
    %v670 = vadd.f32 %v462, %v669
    %v671 = vpop.f32.mrf.mxu0
    %v672 = vadd.f32 %v458, %v671
    %v673 = vpop.f32.mrf.mxu0
    %v674 = vadd.f32 %v462, %v673
    %675 = vmatprep.mubr.bf16.mxu0 %v402
    %676 = vmatmul.mubr.bf16.gmra.mxu0 %v401
    %v677 = vpop.f32.mrf.mxu0
    %v678 = vadd.f32 %v458, %v677
    %v679 = vpop.f32.mrf.mxu0
    %v680 = vadd.f32 %v462, %v679
    %v681 = vpop.f32.mrf.mxu0
    %v682 = vadd.f32 %v458, %v681
    %v683 = vpop.f32.mrf.mxu0
    %v684 = vadd.f32 %v462, %v683
    %685 = vmatprep.mubr.bf16.mxu0 %v404
    %686 = vmatmul.mubr.bf16.gmra.mxu0 %v403
    %v687 = vpop.f32.mrf.mxu0
    %v688 = vadd.f32 %v458, %v687
    %v689 = vpop.f32.mrf.mxu0
    %v690 = vadd.f32 %v462, %v689
    %v691 = vpop.f32.mrf.mxu0
    %v692 = vadd.f32 %v458, %v691
    %v693 = vpop.f32.mrf.mxu0
    %v694 = vadd.f32 %v462, %v693
    %695 = vmatprep.mubr.bf16.mxu0 %v406
    %696 = vmatmul.mubr.bf16.gmra.mxu0 %v405
    %v697 = vpop.f32.mrf.mxu0
    %v698 = vadd.f32 %v458, %v697
    %v699 = vpop.f32.mrf.mxu0
    %v700 = vadd.f32 %v462, %v699
    %v701 = vpop.f32.mrf.mxu0
    %v702 = vadd.f32 %v458, %v701
    %v703 = vpop.f32.mrf.mxu0
    %v704 = vadd.f32 %v462, %v703
    %705 = vmatprep.mubr.bf16.mxu0 %v408
    %706 = vmatmul.mubr.bf16.gmra.mxu0 %v407
    %v707 = vpop.f32.mrf.mxu0
    %v708 = vadd.f32 %v458, %v707
    %v709 = vpop.f32.mrf.mxu0
    %v710 = vadd.f32 %v462, %v709
    %v711 = vpop.f32.mrf.mxu0
    %v712 = vadd.f32 %v458, %v711
    %v713 = vpop.f32.mrf.mxu0
    %v714 = vadd.f32 %v462, %v713
    %715 = vmatprep.mubr.bf16.mxu0 %v410
    %716 = vmatmul.mubr.bf16.gmra.mxu0 %v409
    %v717 = vpop.f32.mrf.mxu0
    %v718 = vadd.f32 %v458, %v717
    %v719 = vpop.f32.mrf.mxu0
    %v720 = vadd.f32 %v462, %v719
    %v721 = vpop.f32.mrf.mxu0
    %v722 = vadd.f32 %v458, %v721
    %v723 = vpop.f32.mrf.mxu0
    %v724 = vadd.f32 %v462, %v723
    %725 = vmatprep.mubr.bf16.mxu0 %v412
    %726 = vmatmul.mubr.bf16.gmra.mxu0 %v411
    %v727 = vpop.f32.mrf.mxu0
    %v728 = vadd.f32 %v458, %v727
    %v729 = vpop.f32.mrf.mxu0
    %v730 = vadd.f32 %v462, %v729
    %v731 = vpop.f32.mrf.mxu0
    %v732 = vadd.f32 %v458, %v731
    %v733 = vpop.f32.mrf.mxu0
    %v734 = vadd.f32 %v462, %v733
    %735 = vdwg.mxu0
    %vm736 = vcmp.gt.f32.partialorder %v658, 0.0
    %vm737 = vcmp.gt.f32.partialorder %v660, 0.0
    %vm738 = vcmp.gt.f32.partialorder %v662, 0.0
    %vm739 = vcmp.gt.f32.partialorder %v664, 0.0
    %vm740 = vcmp.gt.f32.partialorder %v668, 0.0
    %vm741 = vcmp.gt.f32.partialorder %v670, 0.0
    %vm742 = vcmp.gt.f32.partialorder %v672, 0.0
    %vm743 = vcmp.gt.f32.partialorder %v674, 0.0
    %vm744 = vcmp.gt.f32.partialorder %v678, 0.0
    %vm745 = vcmp.gt.f32.partialorder %v680, 0.0
    %vm746 = vcmp.gt.f32.partialorder %v682, 0.0
    %vm747 = vcmp.gt.f32.partialorder %v684, 0.0
    %vm748 = vcmp.gt.f32.partialorder %v688, 0.0
    %vm749 = vcmp.gt.f32.partialorder %v690, 0.0
    %vm750 = vcmp.gt.f32.partialorder %v692, 0.0
    %vm751 = vcmp.gt.f32.partialorder %v694, 0.0
    %vm752 = vcmp.gt.f32.partialorder %v698, 0.0
    %vm753 = vcmp.gt.f32.partialorder %v700, 0.0
    %vm754 = vcmp.gt.f32.partialorder %v702, 0.0
    %vm755 = vcmp.gt.f32.partialorder %v704, 0.0
    %vm756 = vcmp.gt.f32.partialorder %v708, 0.0
    %vm757 = vcmp.gt.f32.partialorder %v710, 0.0
    %vm758 = vcmp.gt.f32.partialorder %v712, 0.0
    %vm759 = vcmp.gt.f32.partialorder %v714, 0.0
    %vm760 = vcmp.gt.f32.partialorder %v718, 0.0
    %vm761 = vcmp.gt.f32.partialorder %v720, 0.0
    %vm762 = vcmp.gt.f32.partialorder %v722, 0.0
    %vm763 = vcmp.gt.f32.partialorder %v724, 0.0
    %vm764 = vcmp.gt.f32.partialorder %v728, 0.0
    %vm765 = vcmp.gt.f32.partialorder %v730, 0.0
    %vm766 = vcmp.gt.f32.partialorder %v732, 0.0
    %vm767 = vcmp.gt.f32.partialorder %v734, 0.0
    %v768 = vmul.f32 %v658, 0.01
    %v769 = vmul.f32 %v660, 0.01
    %v770 = vmul.f32 %v662, 0.01
    %v771 = vmul.f32 %v664, 0.01
    %v772 = vmul.f32 %v668, 0.01
    %v773 = vmul.f32 %v670, 0.01
    %v774 = vmul.f32 %v672, 0.01
    %v775 = vmul.f32 %v674, 0.01
    %v776 = vmul.f32 %v678, 0.01
    %v777 = vmul.f32 %v680, 0.01
    %v778 = vmul.f32 %v682, 0.01
    %v779 = vmul.f32 %v684, 0.01
    %v780 = vmul.f32 %v688, 0.01
    %v781 = vmul.f32 %v690, 0.01
    %v782 = vmul.f32 %v692, 0.01
    %v783 = vmul.f32 %v694, 0.01
    %v784 = vmul.f32 %v698, 0.01
    %v785 = vmul.f32 %v700, 0.01
    %v786 = vmul.f32 %v702, 0.01
    %v787 = vmul.f32 %v704, 0.01
    %v788 = vmul.f32 %v708, 0.01
    %v789 = vmul.f32 %v710, 0.01
    %v790 = vmul.f32 %v712, 0.01
    %v791 = vmul.f32 %v714, 0.01
    %v792 = vmul.f32 %v718, 0.01
    %v793 = vmul.f32 %v720, 0.01
    %v794 = vmul.f32 %v722, 0.01
    %v795 = vmul.f32 %v724, 0.01
    %v796 = vmul.f32 %v728, 0.01
    %v797 = vmul.f32 %v730, 0.01
    %v798 = vmul.f32 %v732, 0.01
    %v799 = vmul.f32 %v734, 0.01
    %v800 = vsel %vm736, %v658, %v768
    %v801 = vsel %vm737, %v660, %v769
    %v802 = vsel %vm738, %v662, %v770
    %v803 = vsel %vm739, %v664, %v771
    %v804 = vsel %vm740, %v668, %v772
    %v805 = vsel %vm741, %v670, %v773
    %v806 = vsel %vm742, %v672, %v774
    %v807 = vsel %vm743, %v674, %v775
    %v808 = vsel %vm744, %v678, %v776
    %v809 = vsel %vm745, %v680, %v777
    %v810 = vsel %vm746, %v682, %v778
    %v811 = vsel %vm747, %v684, %v779
    %v812 = vsel %vm748, %v688, %v780
    %v813 = vsel %vm749, %v690, %v781
    %v814 = vsel %vm750, %v692, %v782
    %v815 = vsel %vm751, %v694, %v783
    %v816 = vsel %vm752, %v698, %v784
    %v817 = vsel %vm753, %v700, %v785
    %v818 = vsel %vm754, %v702, %v786
    %v819 = vsel %vm755, %v704, %v787
    %v820 = vsel %vm756, %v708, %v788
    %v821 = vsel %vm757, %v710, %v789
    %v822 = vsel %vm758, %v712, %v790
    %v823 = vsel %vm759, %v714, %v791
    %v824 = vsel %vm760, %v718, %v792
    %v825 = vsel %vm761, %v720, %v793
    %v826 = vsel %vm762, %v722, %v794
    %v827 = vsel %vm763, %v724, %v795
    %v828 = vsel %vm764, %v728, %v796
    %v829 = vsel %vm765, %v730, %v797
    %v830 = vsel %vm766, %v732, %v798
    %v831 = vsel %vm767, %v734, %v799
    %v832 = vpack.c.bf16 %v802, %v800
    %v833 = vpack.c.bf16 %v803, %v801
    %v834 = vpack.c.bf16 %v806, %v804
    %v835 = vpack.c.bf16 %v807, %v805
    %v836 = vpack.c.bf16 %v810, %v808
    %v837 = vpack.c.bf16 %v811, %v809
    %v838 = vpack.c.bf16 %v814, %v812
    %v839 = vpack.c.bf16 %v815, %v813
    %v840 = vpack.c.bf16 %v818, %v816
    %v841 = vpack.c.bf16 %v819, %v817
    %v842 = vpack.c.bf16 %v822, %v820
    %v843 = vpack.c.bf16 %v823, %v821
    %v844 = vpack.c.bf16 %v826, %v824
    %v845 = vpack.c.bf16 %v827, %v825
    %v846 = vpack.c.bf16 %v830, %v828
    %v847 = vpack.c.bf16 %v831, %v829
    %v848 = vld [vmem:[%s3] sm:$0xf]
    %v849 = vld [vmem:[%s3 + $0x4] sm:$0xf]
    %v850 = vld [vmem:[%s3 + $0x8] sm:$0xf]
    %v851 = vld [vmem:[%s3 + $0xc] sm:$0xf]
    %v852 = vld [vmem:[%s3 + $0x10] sm:$0xf]
    %v853 = vld [vmem:[%s3 + $0x14] sm:$0xf]
    %v854 = vld [vmem:[%s3 + $0x18] sm:$0xf]
    %v855 = vld [vmem:[%s3 + $0x1c] sm:$0xf]
    %v856 = vld [vmem:[%s3 + $0x20] sm:$0xf]
    %v857 = vld [vmem:[%s3 + $0x24] sm:$0xf]
    %v858 = vld [vmem:[%s3 + $0x28] sm:$0xf]
    %v859 = vld [vmem:[%s3 + $0x2c] sm:$0xf]
    %v860 = vld [vmem:[%s3 + $0x30] sm:$0xf]
    %v861 = vld [vmem:[%s3 + $0x34] sm:$0xf]
    %v862 = vld [vmem:[%s3 + $0x38] sm:$0xf]
    %v863 = vld [vmem:[%s3 + $0x3c] sm:$0xf]
    %v864 = vld [vmem:[%s3 + $0x40] sm:$0xf]
    %v865 = vld [vmem:[%s3 + $0x44] sm:$0xf]
    %v866 = vld [vmem:[%s3 + $0x48] sm:$0xf]
    %v867 = vld [vmem:[%s3 + $0x4c] sm:$0xf]
    %v868 = vld [vmem:[%s3 + $0x50] sm:$0xf]
    %v869 = vld [vmem:[%s3 + $0x54] sm:$0xf]
    %v870 = vld [vmem:[%s3 + $0x58] sm:$0xf]
    %v871 = vld [vmem:[%s3 + $0x5c] sm:$0xf]
    %v872 = vld [vmem:[%s3 + $0x60] sm:$0xf]
    %v873 = vld [vmem:[%s3 + $0x64] sm:$0xf]
    %v874 = vld [vmem:[%s3 + $0x68] sm:$0xf]
    %v875 = vld [vmem:[%s3 + $0x6c] sm:$0xf]
    %v876 = vld [vmem:[%s3 + $0x70] sm:$0xf]
    %v877 = vld [vmem:[%s3 + $0x74] sm:$0xf]
    %v878 = vld [vmem:[%s3 + $0x78] sm:$0xf]
    %v879 = vld [vmem:[%s3 + $0x7c] sm:$0xf]
    %v880 = vlaneseq
    %v881 = vshrl.u32 %v880, 7
    %v882 = vsub.s32 2, %v881
    %v883 = vrot.slane %v79, %v882
    %v916 = vunpack.c.l.b16 %v848
    %v917 = vunpack.c.l.b16 %v849
    %v918 = vunpack.c.l.b16 %v850
    %v919 = vunpack.c.l.b16 %v851
    %v920 = vunpack.c.l.b16 %v852
    %v921 = vunpack.c.l.b16 %v853
    %v922 = vunpack.c.l.b16 %v854
    %v923 = vunpack.c.l.b16 %v855
    %v924 = vunpack.c.l.b16 %v856
    %v925 = vunpack.c.l.b16 %v857
    %v926 = vunpack.c.l.b16 %v858
    %v927 = vunpack.c.l.b16 %v859
    %v928 = vunpack.c.l.b16 %v860
    %v929 = vunpack.c.l.b16 %v861
    %v930 = vunpack.c.l.b16 %v862
    %v931 = vunpack.c.l.b16 %v863
    %v932 = vunpack.c.l.b16 %v864
    %v933 = vunpack.c.l.b16 %v865
    %v934 = vunpack.c.l.b16 %v866
    %v935 = vunpack.c.l.b16 %v867
    %v936 = vunpack.c.l.b16 %v868
    %v937 = vunpack.c.l.b16 %v869
    %v938 = vunpack.c.l.b16 %v870
    %v939 = vunpack.c.l.b16 %v871
    %v940 = vunpack.c.l.b16 %v872
    %v941 = vunpack.c.l.b16 %v873
    %v942 = vunpack.c.l.b16 %v874
    %v943 = vunpack.c.l.b16 %v875
    %v944 = vunpack.c.l.b16 %v876
    %v945 = vunpack.c.l.b16 %v877
    %v946 = vunpack.c.l.b16 %v878
    %v947 = vunpack.c.l.b16 %v879
    %v948 = vpack.c.b16 %v917, %v916
    %v949 = vpack.c.b16 %v919, %v918
    %v950 = vpack.c.b16 %v921, %v920
    %v951 = vpack.c.b16 %v923, %v922
    %v952 = vpack.c.b16 %v925, %v924
    %v953 = vpack.c.b16 %v927, %v926
    %v954 = vpack.c.b16 %v929, %v928
    %v955 = vpack.c.b16 %v931, %v930
    %v956 = vpack.c.b16 %v933, %v932
    %v957 = vpack.c.b16 %v935, %v934
    %v958 = vpack.c.b16 %v937, %v936
    %v959 = vpack.c.b16 %v939, %v938
    %v960 = vpack.c.b16 %v941, %v940
    %v961 = vpack.c.b16 %v943, %v942
    %v962 = vpack.c.b16 %v945, %v944
    %v963 = vpack.c.b16 %v947, %v946
    %980 = vmatprep.subr.bf16.mxu0 0
    %981 = vmatpush1.bf16.msra.mxu0 %v955
    %982 = vmatprep.subr.bf16.mxu0 0
    %983 = vmatpush1.bf16.msra.mxu0 %v954
    %984 = vmatprep.subr.bf16.mxu0 0
    %985 = vmatpush1.bf16.msra.mxu0 %v953
    %986 = vmatprep.subr.bf16.mxu0 0
    %987 = vmatpush1.bf16.msra.mxu0 %v952
    %988 = vmatprep.subr.bf16.mxu0 0
    %989 = vmatpush1.bf16.msra.mxu0 %v951
    %990 = vmatprep.subr.bf16.mxu0 0
    %991 = vmatpush1.bf16.msra.mxu0 %v950
    %992 = vmatprep.subr.bf16.mxu0 0
    %993 = vmatpush1.bf16.msra.mxu0 %v949
    %994 = vmatprep.subr.bf16.mxu0 0
    %995 = vmatpush1.bf16.msra.mxu0 %v948
    %996 = vmatprep.subr.bf16.mxu0 0
    %997 = vmatpush2.bf16.msra.mxu0 %v963
    %998 = vmatprep.subr.bf16.mxu0 0
    %999 = vmatpush2.bf16.msra.mxu0 %v962
    %1000 = vmatprep.subr.bf16.mxu0 0
    %1001 = vmatpush2.bf16.msra.mxu0 %v961
    %1002 = vmatprep.subr.bf16.mxu0 0
    %1003 = vmatpush2.bf16.msra.mxu0 %v960
    %1004 = vmatprep.subr.bf16.mxu0 0
    %1005 = vmatpush2.bf16.msra.mxu0 %v959
    %1006 = vmatprep.subr.bf16.mxu0 0
    %1007 = vmatpush2.bf16.msra.mxu0 %v958
    %1008 = vmatprep.subr.bf16.mxu0 0
    %1009 = vmatpush2.bf16.msra.mxu0 %v957
    %1010 = vmatprep.subr.bf16.mxu0 0
    %1011 = vmatpush2.bf16.msra.mxu0 %v956
    %1012 = vmatprep.mubr.bf16.mxu0 %v833
    %1013 = vmatmul.mubr.bf16.gmra.mxu0 %v832
    %v1014 = vpop.f32.mrf.mxu0
    %v1015 = vadd.f32 %v883, %v1014
    %v1016 = vpop.f32.mrf.mxu0
    %v1017 = vpop.f32.mrf.mxu0
    %v1018 = vadd.f32 %v883, %v1017
    %v1019 = vpop.f32.mrf.mxu0
    %1020 = vmatprep.mubr.bf16.mxu0 %v835
    %1021 = vmatmul.mubr.bf16.gmra.mxu0 %v834
    %v1022 = vpop.f32.mrf.mxu0
    %v1023 = vadd.f32 %v883, %v1022
    %v1024 = vpop.f32.mrf.mxu0
    %v1025 = vpop.f32.mrf.mxu0
    %v1026 = vadd.f32 %v883, %v1025
    %v1027 = vpop.f32.mrf.mxu0
    %1028 = vmatprep.mubr.bf16.mxu0 %v837
    %1029 = vmatmul.mubr.bf16.gmra.mxu0 %v836
    %v1030 = vpop.f32.mrf.mxu0
    %v1031 = vadd.f32 %v883, %v1030
    %v1032 = vpop.f32.mrf.mxu0
    %v1033 = vpop.f32.mrf.mxu0
    %v1034 = vadd.f32 %v883, %v1033
    %v1035 = vpop.f32.mrf.mxu0
    %1036 = vmatprep.mubr.bf16.mxu0 %v839
    %1037 = vmatmul.mubr.bf16.gmra.mxu0 %v838
    %v1038 = vpop.f32.mrf.mxu0
    %v1039 = vadd.f32 %v883, %v1038
    %v1040 = vpop.f32.mrf.mxu0
    %v1041 = vpop.f32.mrf.mxu0
    %v1042 = vadd.f32 %v883, %v1041
    %v1043 = vpop.f32.mrf.mxu0
    %1044 = vmatprep.mubr.bf16.mxu0 %v841
    %1045 = vmatmul.mubr.bf16.gmra.mxu0 %v840
    %v1046 = vpop.f32.mrf.mxu0
    %v1047 = vadd.f32 %v883, %v1046
    %v1048 = vpop.f32.mrf.mxu0
    %v1049 = vpop.f32.mrf.mxu0
    %v1050 = vadd.f32 %v883, %v1049
    %v1051 = vpop.f32.mrf.mxu0
    %1052 = vmatprep.mubr.bf16.mxu0 %v843
    %1053 = vmatmul.mubr.bf16.gmra.mxu0 %v842
    %v1054 = vpop.f32.mrf.mxu0
    %v1055 = vadd.f32 %v883, %v1054
    %v1056 = vpop.f32.mrf.mxu0
    %v1057 = vpop.f32.mrf.mxu0
    %v1058 = vadd.f32 %v883, %v1057
    %v1059 = vpop.f32.mrf.mxu0
    %1060 = vmatprep.mubr.bf16.mxu0 %v845
    %1061 = vmatmul.mubr.bf16.gmra.mxu0 %v844
    %v1062 = vpop.f32.mrf.mxu0
    %v1063 = vadd.f32 %v883, %v1062
    %v1064 = vpop.f32.mrf.mxu0
    %v1065 = vpop.f32.mrf.mxu0
    %v1066 = vadd.f32 %v883, %v1065
    %v1067 = vpop.f32.mrf.mxu0
    %1068 = vmatprep.mubr.bf16.mxu0 %v847
    %1069 = vmatmul.mubr.bf16.gmra.mxu0 %v846
    %v1070 = vpop.f32.mrf.mxu0
    %v1071 = vadd.f32 %v883, %v1070
    %v1072 = vpop.f32.mrf.mxu0
    %v1073 = vpop.f32.mrf.mxu0
    %v1074 = vadd.f32 %v883, %v1073
    %v1075 = vpop.f32.mrf.mxu0
    %1076 = vdwg.mxu0
    %v1077 = vlaneseq
    %v1078 = vshrl.u32 %v1077, 7
    %v1079 = vadd.s32 %v1078, 8
    %v1080 = vadd.s32 %v1078, 16
    %v1081 = vadd.s32 %v1078, 24
    %v1082 = vadd.s32 %v1078, 32
    %v1083 = vadd.s32 %v1078, 40
    %v1084 = vadd.s32 %v1078, 48
    %v1085 = vadd.s32 %v1078, 56
    %v1086 = vadd.s32 %v1078, 64
    %v1087 = vadd.s32 %v1078, 72
    %v1088 = vadd.s32 %v1078, 80
    %v1089 = vadd.s32 %v1078, 88
    %v1090 = vadd.s32 %v1078, 96
    %v1091 = vadd.s32 %v1078, 104
    %v1092 = vadd.s32 %v1078, 112
    %v1093 = vadd.s32 %v1078, 120
    %v1094 = vlaneseq
    %v1095 = vand.u32 %v1094, 127
    %v1096 = vmul.u32 %v1095, 64
    %vm1097 = vcmp.ge.s32.totalorder %v1078, %v1096
    %vm1098 = vcmp.ge.s32.totalorder %v1079, %v1096
    %vm1099 = vcmp.ge.s32.totalorder %v1080, %v1096
    %vm1100 = vcmp.ge.s32.totalorder %v1081, %v1096
    %vm1101 = vcmp.ge.s32.totalorder %v1082, %v1096
    %vm1102 = vcmp.ge.s32.totalorder %v1083, %v1096
    %vm1103 = vcmp.ge.s32.totalorder %v1084, %v1096
    %vm1104 = vcmp.ge.s32.totalorder %v1085, %v1096
    %vm1105 = vcmp.ge.s32.totalorder %v1086, %v1096
    %vm1106 = vcmp.ge.s32.totalorder %v1087, %v1096
    %vm1107 = vcmp.ge.s32.totalorder %v1088, %v1096
    %vm1108 = vcmp.ge.s32.totalorder %v1089, %v1096
    %vm1109 = vcmp.ge.s32.totalorder %v1090, %v1096
    %vm1110 = vcmp.ge.s32.totalorder %v1091, %v1096
    %vm1111 = vcmp.ge.s32.totalorder %v1092, %v1096
    %vm1112 = vcmp.ge.s32.totalorder %v1093, %v1096
    %v1113 = vadd.s32 %v1095, 1
    %v1114 = vmul.u32 %v1113, 64
    %vm1115 = vcmp.lt.s32.totalorder %v1078, %v1114
    %vm1116 = vcmp.lt.s32.totalorder %v1079, %v1114
    %vm1117 = vcmp.lt.s32.totalorder %v1080, %v1114
    %vm1118 = vcmp.lt.s32.totalorder %v1081, %v1114
    %vm1119 = vcmp.lt.s32.totalorder %v1082, %v1114
    %vm1120 = vcmp.lt.s32.totalorder %v1083, %v1114
    %vm1121 = vcmp.lt.s32.totalorder %v1084, %v1114
    %vm1122 = vcmp.lt.s32.totalorder %v1085, %v1114
    %vm1123 = vcmp.lt.s32.totalorder %v1086, %v1114
    %vm1124 = vcmp.lt.s32.totalorder %v1087, %v1114
    %vm1125 = vcmp.lt.s32.totalorder %v1088, %v1114
    %vm1126 = vcmp.lt.s32.totalorder %v1089, %v1114
    %vm1127 = vcmp.lt.s32.totalorder %v1090, %v1114
    %vm1128 = vcmp.lt.s32.totalorder %v1091, %v1114
    %vm1129 = vcmp.lt.s32.totalorder %v1092, %v1114
    %vm1130 = vcmp.lt.s32.totalorder %v1093, %v1114
    %vm1131 = vmand %vm1097, %vm1115
    %vm1132 = vmand %vm1098, %vm1116
    %vm1133 = vmand %vm1099, %vm1117
    %vm1134 = vmand %vm1100, %vm1118
    %vm1135 = vmand %vm1101, %vm1119
    %vm1136 = vmand %vm1102, %vm1120
    %vm1137 = vmand %vm1103, %vm1121
    %vm1138 = vmand %vm1104, %vm1122
    %vm1139 = vmand %vm1105, %vm1123
    %vm1140 = vmand %vm1106, %vm1124
    %vm1141 = vmand %vm1107, %vm1125
    %vm1142 = vmand %vm1108, %vm1126
    %vm1143 = vmand %vm1109, %vm1127
    %vm1144 = vmand %vm1110, %vm1128
    %vm1145 = vmand %vm1111, %vm1129
    %vm1146 = vmand %vm1112, %vm1130
    %v1147 = vsel %vm1131, 1, 0
    %v1148 = vsel %vm1132, 1, 0
    %v1149 = vsel %vm1133, 1, 0
    %v1150 = vsel %vm1134, 1, 0
    %v1151 = vsel %vm1135, 1, 0
    %v1152 = vsel %vm1136, 1, 0
    %v1153 = vsel %vm1137, 1, 0
    %v1154 = vsel %vm1138, 1, 0
    %v1155 = vsel %vm1139, 1, 0
    %v1156 = vsel %vm1140, 1, 0
    %v1157 = vsel %vm1141, 1, 0
    %v1158 = vsel %vm1142, 1, 0
    %v1159 = vsel %vm1143, 1, 0
    %v1160 = vsel %vm1144, 1, 0
    %v1161 = vsel %vm1145, 1, 0
    %v1162 = vsel %vm1146, 1, 0
    %v1163 = vcvt.s32.f32 %v1147
    %v1164 = vcvt.s32.f32 %v1148
    %v1165 = vcvt.s32.f32 %v1149
    %v1166 = vcvt.s32.f32 %v1150
    %v1167 = vcvt.s32.f32 %v1151
    %v1168 = vcvt.s32.f32 %v1152
    %v1169 = vcvt.s32.f32 %v1153
    %v1170 = vcvt.s32.f32 %v1154
    %v1171 = vcvt.s32.f32 %v1155
    %v1172 = vcvt.s32.f32 %v1156
    %v1173 = vcvt.s32.f32 %v1157
    %v1174 = vcvt.s32.f32 %v1158
    %v1175 = vcvt.s32.f32 %v1159
    %v1176 = vcvt.s32.f32 %v1160
    %v1177 = vcvt.s32.f32 %v1161
    %v1178 = vcvt.s32.f32 %v1162
    %1180 = vset.pattern.permute.xlu0 127
    %1181 = vperm.xlu0 %1180, %v1015
    %v1182 = vpop.permute.xlu0 %1181
    %1185 = vset.pattern.permute.xlu0 127
    %1186 = vperm.xlu0 %1185, %v1018
    %v1187 = vpop.permute.xlu0 %1186
    %1190 = vset.pattern.permute.xlu0 127
    %1191 = vperm.xlu0 %1190, %v1023
    %v1192 = vpop.permute.xlu0 %1191
    %1195 = vset.pattern.permute.xlu0 127
    %1196 = vperm.xlu0 %1195, %v1026
    %v1197 = vpop.permute.xlu0 %1196
    %1200 = vset.pattern.permute.xlu0 127
    %1201 = vperm.xlu0 %1200, %v1031
    %v1202 = vpop.permute.xlu0 %1201
    %1205 = vset.pattern.permute.xlu0 127
    %1206 = vperm.xlu0 %1205, %v1034
    %v1207 = vpop.permute.xlu0 %1206
    %1210 = vset.pattern.permute.xlu0 127
    %1211 = vperm.xlu0 %1210, %v1039
    %v1212 = vpop.permute.xlu0 %1211
    %1215 = vset.pattern.permute.xlu0 127
    %1216 = vperm.xlu0 %1215, %v1042
    %v1217 = vpop.permute.xlu0 %1216
    %1220 = vset.pattern.permute.xlu0 127
    %1221 = vperm.xlu0 %1220, %v1047
    %v1222 = vpop.permute.xlu0 %1221
    %1225 = vset.pattern.permute.xlu0 127
    %1226 = vperm.xlu0 %1225, %v1050
    %v1227 = vpop.permute.xlu0 %1226
    %1230 = vset.pattern.permute.xlu0 127
    %1231 = vperm.xlu0 %1230, %v1055
    %v1232 = vpop.permute.xlu0 %1231
    %1235 = vset.pattern.permute.xlu0 127
    %1236 = vperm.xlu0 %1235, %v1058
    %v1237 = vpop.permute.xlu0 %1236
    %1240 = vset.pattern.permute.xlu0 127
    %1241 = vperm.xlu0 %1240, %v1063
    %v1242 = vpop.permute.xlu0 %1241
    %1245 = vset.pattern.permute.xlu0 127
    %1246 = vperm.xlu0 %1245, %v1066
    %v1247 = vpop.permute.xlu0 %1246
    %1250 = vset.pattern.permute.xlu0 127
    %1251 = vperm.xlu0 %1250, %v1071
    %v1252 = vpop.permute.xlu0 %1251
    %1255 = vset.pattern.permute.xlu0 127
    %1256 = vperm.xlu0 %1255, %v1074
    %v1257 = vpop.permute.xlu0 %1256
    %v1259 = vsel %vm1131, %v1182, -1e+30
    %v1260 = vsel %vm1132, %v1187, -1e+30
    %v1261 = vsel %vm1133, %v1192, -1e+30
    %v1262 = vsel %vm1134, %v1197, -1e+30
    %v1263 = vsel %vm1135, %v1202, -1e+30
    %v1264 = vsel %vm1136, %v1207, -1e+30
    %v1265 = vsel %vm1137, %v1212, -1e+30
    %v1266 = vsel %vm1138, %v1217, -1e+30
    %v1267 = vsel %vm1139, %v1222, -1e+30
    %v1268 = vsel %vm1140, %v1227, -1e+30
    %v1269 = vsel %vm1141, %v1232, -1e+30
    %v1270 = vsel %vm1142, %v1237, -1e+30
    %v1271 = vsel %vm1143, %v1242, -1e+30
    %v1272 = vsel %vm1144, %v1247, -1e+30
    %v1273 = vsel %vm1145, %v1252, -1e+30
    %v1274 = vsel %vm1146, %v1257, -1e+30
    %vm1275 = vcmask 15360
    %v1276 = vsel %vm1275, %v1259, -inf
    %v1277 = vsel %vm1275, %v1260, -inf
    %v1278 = vsel %vm1275, %v1261, -inf
    %v1279 = vsel %vm1275, %v1262, -inf
    %v1280 = vsel %vm1275, %v1263, -inf
    %v1281 = vmax.f32 %v1276, %v1280
    %v1282 = vsel %vm1275, %v1264, -inf
    %v1283 = vmax.f32 %v1277, %v1282
    %v1284 = vsel %vm1275, %v1265, -inf
    %v1285 = vmax.f32 %v1278, %v1284
    %v1286 = vsel %vm1275, %v1266, -inf
    %v1287 = vmax.f32 %v1279, %v1286
    %v1288 = vsel %vm1275, %v1267, -inf
    %v1289 = vmax.f32 %v1281, %v1288
    %v1290 = vsel %vm1275, %v1268, -inf
    %v1291 = vmax.f32 %v1283, %v1290
    %v1292 = vsel %vm1275, %v1269, -inf
    %v1293 = vmax.f32 %v1285, %v1292
    %v1294 = vsel %vm1275, %v1270, -inf
    %v1295 = vmax.f32 %v1287, %v1294
    %v1296 = vsel %vm1275, %v1271, -inf
    %v1297 = vmax.f32 %v1289, %v1296
    %v1298 = vsel %vm1275, %v1272, -inf
    %v1299 = vmax.f32 %v1291, %v1298
    %v1300 = vsel %vm1275, %v1273, -inf
    %v1301 = vmax.f32 %v1293, %v1300
    %v1302 = vsel %vm1275, %v1274, -inf
    %v1303 = vmax.f32 %v1295, %v1302
    %v1304 = vmax.f32 %v1297, %v1299
    %v1305 = vmax.f32 %v1301, %v1303
    %v1306 = vmax.f32 %v1304, %v1305
    %v1307 = vrot.slane %v1306, 4
    %v1308 = vmax.f32 %v1306, %v1307
    %v1309 = vrot.slane %v1308, 2
    %v1310 = vmax.f32 %v1308, %v1309
    %v1311 = vrot.slane %v1310, 1
    %v1312 = vmax.f32 %v1310, %v1311
    %v1313 = vmul.f32 %v1163, %v1312
    %v1314 = vmul.f32 %v1164, %v1312
    %v1315 = vmul.f32 %v1165, %v1312
    %v1316 = vmul.f32 %v1166, %v1312
    %v1317 = vmul.f32 %v1167, %v1312
    %v1318 = vmul.f32 %v1168, %v1312
    %v1319 = vmul.f32 %v1169, %v1312
    %v1320 = vmul.f32 %v1170, %v1312
    %v1321 = vmul.f32 %v1171, %v1312
    %v1322 = vmul.f32 %v1172, %v1312
    %v1323 = vmul.f32 %v1173, %v1312
    %v1324 = vmul.f32 %v1174, %v1312
    %v1325 = vmul.f32 %v1175, %v1312
    %v1326 = vmul.f32 %v1176, %v1312
    %v1327 = vmul.f32 %v1177, %v1312
    %v1328 = vmul.f32 %v1178, %v1312
    %v1329 = vsel %vm1275, %v1313, 0.0
    %1330 = vadd.xlane.f32.xlu0 %v1329
    %v1331 = vpop.xlane.xlu0 %1330
    %v1332 = vsel %vm1275, %v1314, 0.0
    %1333 = vadd.xlane.f32.xlu0 %v1332
    %v1334 = vpop.xlane.xlu0 %1333
    %v1335 = vsel %vm1275, %v1315, 0.0
    %1336 = vadd.xlane.f32.xlu0 %v1335
    %v1337 = vpop.xlane.xlu0 %1336
    %v1338 = vsel %vm1275, %v1316, 0.0
    %1339 = vadd.xlane.f32.xlu0 %v1338
    %v1340 = vpop.xlane.xlu0 %1339
    %v1341 = vsel %vm1275, %v1317, 0.0
    %1342 = vadd.xlane.f32.xlu0 %v1341
    %v1343 = vpop.xlane.xlu0 %1342
    %v1344 = vsel %vm1275, %v1318, 0.0
    %1345 = vadd.xlane.f32.xlu0 %v1344
    %v1346 = vpop.xlane.xlu0 %1345
    %v1347 = vsel %vm1275, %v1319, 0.0
    %1348 = vadd.xlane.f32.xlu0 %v1347
    %v1349 = vpop.xlane.xlu0 %1348
    %v1350 = vsel %vm1275, %v1320, 0.0
    %1351 = vadd.xlane.f32.xlu0 %v1350
    %v1352 = vpop.xlane.xlu0 %1351
    %v1353 = vsel %vm1275, %v1321, 0.0
    %1354 = vadd.xlane.f32.xlu0 %v1353
    %v1355 = vpop.xlane.xlu0 %1354
    %v1356 = vsel %vm1275, %v1322, 0.0
    %1357 = vadd.xlane.f32.xlu0 %v1356
    %v1358 = vpop.xlane.xlu0 %1357
    %v1359 = vsel %vm1275, %v1323, 0.0
    %1360 = vadd.xlane.f32.xlu0 %v1359
    %v1361 = vpop.xlane.xlu0 %1360
    %v1362 = vsel %vm1275, %v1324, 0.0
    %1363 = vadd.xlane.f32.xlu0 %v1362
    %v1364 = vpop.xlane.xlu0 %1363
    %v1365 = vsel %vm1275, %v1325, 0.0
    %1366 = vadd.xlane.f32.xlu0 %v1365
    %v1367 = vpop.xlane.xlu0 %1366
    %v1368 = vsel %vm1275, %v1326, 0.0
    %1369 = vadd.xlane.f32.xlu0 %v1368
    %v1370 = vpop.xlane.xlu0 %1369
    %v1371 = vsel %vm1275, %v1327, 0.0
    %1372 = vadd.xlane.f32.xlu0 %v1371
    %v1373 = vpop.xlane.xlu0 %1372
    %v1374 = vsel %vm1275, %v1328, 0.0
    %1375 = vadd.xlane.f32.xlu0 %v1374
    %v1376 = vpop.xlane.xlu0 %1375
    %v1377 = vsub.f32 %v1015, %v1331
    %v1378 = vsub.f32 %v1018, %v1334
    %v1379 = vsub.f32 %v1023, %v1337
    %v1380 = vsub.f32 %v1026, %v1340
    %v1381 = vsub.f32 %v1031, %v1343
    %v1382 = vsub.f32 %v1034, %v1346
    %v1383 = vsub.f32 %v1039, %v1349
    %v1384 = vsub.f32 %v1042, %v1352
    %v1385 = vsub.f32 %v1047, %v1355
    %v1386 = vsub.f32 %v1050, %v1358
    %v1387 = vsub.f32 %v1055, %v1361
    %v1388 = vsub.f32 %v1058, %v1364
    %v1389 = vsub.f32 %v1063, %v1367
    %v1390 = vsub.f32 %v1066, %v1370
    %v1391 = vsub.f32 %v1071, %v1373
    %v1392 = vsub.f32 %v1074, %v1376
    %v1393 = vmul.f32 %v1377, 1.442695
    %v1394 = vpow.pop %v1393
    %v1395 = vmul.f32 %v1378, 1.442695
    %v1396 = vpow.pop %v1395
    %v1397 = vmul.f32 %v1379, 1.442695
    %v1398 = vpow.pop %v1397
    %v1399 = vmul.f32 %v1380, 1.442695
    %v1400 = vpow.pop %v1399
    %v1401 = vmul.f32 %v1381, 1.442695
    %v1402 = vpow.pop %v1401
    %v1403 = vmul.f32 %v1382, 1.442695
    %v1404 = vpow.pop %v1403
    %v1405 = vmul.f32 %v1383, 1.442695
    %v1406 = vpow.pop %v1405
    %v1407 = vmul.f32 %v1384, 1.442695
    %v1408 = vpow.pop %v1407
    %v1409 = vmul.f32 %v1385, 1.442695
    %v1410 = vpow.pop %v1409
    %v1411 = vmul.f32 %v1386, 1.442695
    %v1412 = vpow.pop %v1411
    %v1413 = vmul.f32 %v1387, 1.442695
    %v1414 = vpow.pop %v1413
    %v1415 = vmul.f32 %v1388, 1.442695
    %v1416 = vpow.pop %v1415
    %v1417 = vmul.f32 %v1389, 1.442695
    %v1418 = vpow.pop %v1417
    %v1419 = vmul.f32 %v1390, 1.442695
    %v1420 = vpow.pop %v1419
    %v1421 = vmul.f32 %v1391, 1.442695
    %v1422 = vpow.pop %v1421
    %v1423 = vmul.f32 %v1392, 1.442695
    %v1424 = vpow.pop %v1423
    %1426 = vset.pattern.permute.xlu0 127
    %1427 = vperm.xlu0 %1426, %v1394
    %v1428 = vpop.permute.xlu0 %1427
    %1431 = vset.pattern.permute.xlu0 127
    %1432 = vperm.xlu0 %1431, %v1396
    %v1433 = vpop.permute.xlu0 %1432
    %1436 = vset.pattern.permute.xlu0 127
    %1437 = vperm.xlu0 %1436, %v1398
    %v1438 = vpop.permute.xlu0 %1437
    %1441 = vset.pattern.permute.xlu0 127
    %1442 = vperm.xlu0 %1441, %v1400
    %v1443 = vpop.permute.xlu0 %1442
    %1446 = vset.pattern.permute.xlu0 127
    %1447 = vperm.xlu0 %1446, %v1402
    %v1448 = vpop.permute.xlu0 %1447
    %1451 = vset.pattern.permute.xlu0 127
    %1452 = vperm.xlu0 %1451, %v1404
    %v1453 = vpop.permute.xlu0 %1452
    %1456 = vset.pattern.permute.xlu0 127
    %1457 = vperm.xlu0 %1456, %v1406
    %v1458 = vpop.permute.xlu0 %1457
    %1461 = vset.pattern.permute.xlu0 127
    %1462 = vperm.xlu0 %1461, %v1408
    %v1463 = vpop.permute.xlu0 %1462
    %1466 = vset.pattern.permute.xlu0 127
    %1467 = vperm.xlu0 %1466, %v1410
    %v1468 = vpop.permute.xlu0 %1467
    %1471 = vset.pattern.permute.xlu0 127
    %1472 = vperm.xlu0 %1471, %v1412
    %v1473 = vpop.permute.xlu0 %1472
    %1476 = vset.pattern.permute.xlu0 127
    %1477 = vperm.xlu0 %1476, %v1414
    %v1478 = vpop.permute.xlu0 %1477
    %1481 = vset.pattern.permute.xlu0 127
    %1482 = vperm.xlu0 %1481, %v1416
    %v1483 = vpop.permute.xlu0 %1482
    %1486 = vset.pattern.permute.xlu0 127
    %1487 = vperm.xlu0 %1486, %v1418
    %v1488 = vpop.permute.xlu0 %1487
    %1491 = vset.pattern.permute.xlu0 127
    %1492 = vperm.xlu0 %1491, %v1420
    %v1493 = vpop.permute.xlu0 %1492
    %1496 = vset.pattern.permute.xlu0 127
    %1497 = vperm.xlu0 %1496, %v1422
    %v1498 = vpop.permute.xlu0 %1497
    %1501 = vset.pattern.permute.xlu0 127
    %1502 = vperm.xlu0 %1501, %v1424
    %v1503 = vpop.permute.xlu0 %1502
    %v1505 = vmul.f32 %v1428, %v1015
    %v1506 = vmul.f32 %v1433, %v1018
    %v1507 = vmul.f32 %v1438, %v1023
    %v1508 = vmul.f32 %v1443, %v1026
    %v1509 = vmul.f32 %v1448, %v1031
    %v1510 = vmul.f32 %v1453, %v1034
    %v1511 = vmul.f32 %v1458, %v1039
    %v1512 = vmul.f32 %v1463, %v1042
    %v1513 = vmul.f32 %v1468, %v1047
    %v1514 = vmul.f32 %v1473, %v1050
    %v1515 = vmul.f32 %v1478, %v1055
    %v1516 = vmul.f32 %v1483, %v1058
    %v1517 = vmul.f32 %v1488, %v1063
    %v1518 = vmul.f32 %v1493, %v1066
    %v1519 = vmul.f32 %v1498, %v1071
    %v1520 = vmul.f32 %v1503, %v1074
    %1521 = vxpose.xlu0.b32.start [1/16] %v1163, 128
    %1522 = vxpose.xlu0.b32.cont [2/16] %v1164, 128
    %1523 = vxpose.xlu0.b32.cont [3/16] %v1165, 128
    %1524 = vxpose.xlu0.b32.cont [4/16] %v1166, 128
    %1525 = vxpose.xlu0.b32.cont [5/16] %v1167, 128
    %1526 = vxpose.xlu0.b32.cont [6/16] %v1168, 128
    %1527 = vxpose.xlu0.b32.cont [7/16] %v1169, 128
    %1528 = vxpose.xlu0.b32.cont [8/16] %v1170, 128
    %1529 = vxpose.xlu0.b32.cont [9/16] %v1171, 128
    %1530 = vxpose.xlu0.b32.cont [10/16] %v1172, 128
    %1531 = vxpose.xlu0.b32.cont [11/16] %v1173, 128
    %1532 = vxpose.xlu0.b32.cont [12/16] %v1174, 128
    %1533 = vxpose.xlu0.b32.cont [13/16] %v1175, 128
    %1534 = vxpose.xlu0.b32.cont [14/16] %v1176, 128
    %1535 = vxpose.xlu0.b32.cont [15/16] %v1177, 128
    %1536 = vxpose.xlu0.b32.end [16/16] %v1178, 128
    %v1537 = vpop.trf.xlu0
    %v1538 = vpop.trf.xlu0
    %v1539 = vpop.trf.xlu0
    %v1540 = vpop.trf.xlu0
    %v1541 = vpop.trf.xlu0
    %v1542 = vpop.trf.xlu0
    %v1543 = vpop.trf.xlu0
    %v1544 = vpop.trf.xlu0
    %v1545 = vpop.trf.xlu0
    %v1546 = vpop.trf.xlu0
    %v1547 = vpop.trf.xlu0
    %v1548 = vpop.trf.xlu0
    %v1549 = vpop.trf.xlu0
    %v1550 = vpop.trf.xlu0
    %v1551 = vpop.trf.xlu0
    %v1552 = vpop.trf.xlu0
    %1553 = vmatprep.subr.mxu0 0.0
    %1554 = vmatpush1.msra.mxu0 %v1520
    %1555 = vmatprep.subr.mxu0 0.0
    %1556 = vmatpush1.msra.mxu0 %v1519
    %1557 = vmatprep.subr.mxu0 0.0
    %1558 = vmatpush1.msra.mxu0 %v1518
    %1559 = vmatprep.subr.mxu0 0.0
    %1560 = vmatpush1.msra.mxu0 %v1517
    %1561 = vmatprep.subr.mxu0 0.0
    %1562 = vmatpush1.msra.mxu0 %v1516
    %1563 = vmatprep.subr.mxu0 0.0
    %1564 = vmatpush1.msra.mxu0 %v1515
    %1565 = vmatprep.subr.mxu0 0.0
    %1566 = vmatpush1.msra.mxu0 %v1514
    %1567 = vmatprep.subr.mxu0 0.0
    %1568 = vmatpush1.msra.mxu0 %v1513
    %1569 = vmatprep.subr.mxu0 0.0
    %1570 = vmatpush1.msra.mxu0 %v1512
    %1571 = vmatprep.subr.mxu0 0.0
    %1572 = vmatpush1.msra.mxu0 %v1511
    %1573 = vmatprep.subr.mxu0 0.0
    %1574 = vmatpush1.msra.mxu0 %v1510
    %1575 = vmatprep.subr.mxu0 0.0
    %1576 = vmatpush1.msra.mxu0 %v1509
    %1577 = vmatprep.subr.mxu0 0.0
    %1578 = vmatpush1.msra.mxu0 %v1508
    %1579 = vmatprep.subr.mxu0 0.0
    %1580 = vmatpush1.msra.mxu0 %v1507
    %1581 = vmatprep.subr.mxu0 0.0
    %1582 = vmatpush1.msra.mxu0 %v1506
    %1583 = vmatprep.subr.mxu0 0.0
    %1584 = vmatpush1.msra.mxu0 %v1505
    %1585 = vmatprep.subr.mxu0 0.0
    %1586 = vmatpush2.msra.mxu0 0.0
    %1587 = vmatprep.subr.mxu0 0.0
    %1588 = vmatpush2.msra.mxu0 0.0
    %1589 = vmatprep.subr.mxu0 0.0
    %1590 = vmatpush2.msra.mxu0 0.0
    %1591 = vmatprep.subr.mxu0 0.0
    %1592 = vmatpush2.msra.mxu0 0.0
    %1593 = vmatprep.subr.mxu0 0.0
    %1594 = vmatpush2.msra.mxu0 0.0
    %1595 = vmatprep.subr.mxu0 0.0
    %1596 = vmatpush2.msra.mxu0 0.0
    %1597 = vmatprep.subr.mxu0 0.0
    %1598 = vmatpush2.msra.mxu0 0.0
    %1599 = vmatprep.subr.mxu0 0.0
    %1600 = vmatpush2.msra.mxu0 0.0
    %1601 = vmatprep.subr.mxu0 0.0
    %1602 = vmatpush2.msra.mxu0 0.0
    %1603 = vmatprep.subr.mxu0 0.0
    %1604 = vmatpush2.msra.mxu0 0.0
    %1605 = vmatprep.subr.mxu0 0.0
    %1606 = vmatpush2.msra.mxu0 0.0
    %1607 = vmatprep.subr.mxu0 0.0
    %1608 = vmatpush2.msra.mxu0 0.0
    %1609 = vmatprep.subr.mxu0 0.0
    %1610 = vmatpush2.msra.mxu0 0.0
    %1611 = vmatprep.subr.mxu0 0.0
    %1612 = vmatpush2.msra.mxu0 0.0
    %1613 = vmatprep.subr.mxu0 0.0
    %1614 = vmatpush2.msra.mxu0 0.0
    %1615 = vmatprep.subr.mxu0 0.0
    %1616 = vmatpush2.msra.mxu0 0.0
    %1617 = vmatprep.mubr.f32.mxu0 0.0
    %1618 = vmatmul.mubr.f32.gmra.mxu0 %v1537
    %v1619 = vpop.f32.mrf.mxu0
    %v1620 = vadd.f32 0.0, %v1619
    %v1621 = vpop.f32.mrf.mxu0
    %1622 = vdwg.mxu0
    %1624 = vset.pattern.permute.xlu0 126
    %1625 = vperm.xlu0 %1624, %v1620
    %v1626 = vpop.permute.xlu0 %1625
    %v1628 = vrcp.pop %v1626
    %v1629 = vmul.f32 %v1620, %v1628
    %v1630 = vpack.c.bf16 %v1629, %v1629
    %v1631 = vld [vmem:[%s4] sm:$0xf]
    %v1632 = vld [vmem:[%s4 + $0x4] sm:$0xf]
    %v1633 = vld [vmem:[%s4 + $0x8] sm:$0xf]
    %v1634 = vld [vmem:[%s4 + $0xc] sm:$0xf]
    %v1635 = vld [vmem:[%s4 + $0x10] sm:$0xf]
    %v1636 = vld [vmem:[%s4 + $0x14] sm:$0xf]
    %v1637 = vld [vmem:[%s4 + $0x18] sm:$0xf]
    %v1638 = vld [vmem:[%s4 + $0x1c] sm:$0xf]
    %v1639 = vld [vmem:[%s4 + $0x20] sm:$0xf]
    %v1640 = vld [vmem:[%s4 + $0x24] sm:$0xf]
    %v1641 = vld [vmem:[%s4 + $0x28] sm:$0xf]
    %v1642 = vld [vmem:[%s4 + $0x2c] sm:$0xf]
    %v1643 = vld [vmem:[%s4 + $0x30] sm:$0xf]
    %v1644 = vld [vmem:[%s4 + $0x34] sm:$0xf]
    %v1645 = vld [vmem:[%s4 + $0x38] sm:$0xf]
    %v1646 = vld [vmem:[%s4 + $0x3c] sm:$0xf]
    %v1647 = vlaneseq
    %v1648 = vshrl.u32 %v1647, 7
    %v1649 = vsub.s32 3, %v1648
    %v1650 = vrot.slane %v79, %v1649
    %v1667 = vunpack.c.l.b16 %v1631
    %v1668 = vunpack.c.l.b16 %v1632
    %v1669 = vunpack.c.l.b16 %v1633
    %v1670 = vunpack.c.l.b16 %v1634
    %v1671 = vunpack.c.l.b16 %v1635
    %v1672 = vunpack.c.l.b16 %v1636
    %v1673 = vunpack.c.l.b16 %v1637
    %v1674 = vunpack.c.l.b16 %v1638
    %v1675 = vunpack.c.l.b16 %v1639
    %v1676 = vunpack.c.l.b16 %v1640
    %v1677 = vunpack.c.l.b16 %v1641
    %v1678 = vunpack.c.l.b16 %v1642
    %v1679 = vunpack.c.l.b16 %v1643
    %v1680 = vunpack.c.l.b16 %v1644
    %v1681 = vunpack.c.l.b16 %v1645
    %v1682 = vunpack.c.l.b16 %v1646
    %v1683 = vpack.c.b16 %v1668, %v1667
    %v1684 = vpack.c.b16 %v1670, %v1669
    %v1685 = vpack.c.b16 %v1672, %v1671
    %v1686 = vpack.c.b16 %v1674, %v1673
    %v1687 = vpack.c.b16 %v1676, %v1675
    %v1688 = vpack.c.b16 %v1678, %v1677
    %v1689 = vpack.c.b16 %v1680, %v1679
    %v1690 = vpack.c.b16 %v1682, %v1681
    %1699 = vmatprep.subr.bf16.mxu0 0
    %1700 = vmatpush1.bf16.msra.mxu0 %v1690
    %1701 = vmatprep.subr.bf16.mxu0 0
    %1702 = vmatpush1.bf16.msra.mxu0 %v1689
    %1703 = vmatprep.subr.bf16.mxu0 0
    %1704 = vmatpush1.bf16.msra.mxu0 %v1688
    %1705 = vmatprep.subr.bf16.mxu0 0
    %1706 = vmatpush1.bf16.msra.mxu0 %v1687
    %1707 = vmatprep.subr.bf16.mxu0 0
    %1708 = vmatpush1.bf16.msra.mxu0 %v1686
    %1709 = vmatprep.subr.bf16.mxu0 0
    %1710 = vmatpush1.bf16.msra.mxu0 %v1685
    %1711 = vmatprep.subr.bf16.mxu0 0
    %1712 = vmatpush1.bf16.msra.mxu0 %v1684
    %1713 = vmatprep.subr.bf16.mxu0 0
    %1714 = vmatpush1.bf16.msra.mxu0 %v1683
    %1715 = vmatprep.subr.bf16.mxu0 0
    %1716 = vmatpush2.bf16.msra.mxu0 0
    %1717 = vmatprep.subr.bf16.mxu0 0
    %1718 = vmatpush2.bf16.msra.mxu0 0
    %1719 = vmatprep.subr.bf16.mxu0 0
    %1720 = vmatpush2.bf16.msra.mxu0 0
    %1721 = vmatprep.subr.bf16.mxu0 0
    %1722 = vmatpush2.bf16.msra.mxu0 0
    %1723 = vmatprep.subr.bf16.mxu0 0
    %1724 = vmatpush2.bf16.msra.mxu0 0
    %1725 = vmatprep.subr.bf16.mxu0 0
    %1726 = vmatpush2.bf16.msra.mxu0 0
    %1727 = vmatprep.subr.bf16.mxu0 0
    %1728 = vmatpush2.bf16.msra.mxu0 0
    %1729 = vmatprep.subr.bf16.mxu0 0
    %1730 = vmatpush2.bf16.msra.mxu0 0
    %1731 = vmatprep.mubr.bf16.mxu0 0
    %1732 = vmatmul.mubr.bf16.gmra.mxu0 %v1630
    %v1733 = vpop.f32.mrf.mxu0
    %v1734 = vadd.f32 %v1650, %v1733
    %v1735 = vpop.f32.mrf.mxu0
    %v1736 = vpop.f32.mrf.mxu0
    %v1737 = vpop.f32.mrf.mxu0
    %1738 = vdwg.mxu0
    %vm1739 = vcmp.ge.s32.totalorder %v1095, 16
    %v1740 = vmin.f32 %v1734, 10.0
    %v1741 = vsel %vm1739, %v1740, %v1734
    %1742 = vst [vmem:[%s6] sm:$0x3] %v1741
    // Predicated region
    $region38: #{vgae_encode.1} parent=1 // pred_check
      _
    $region39: #{vgae_encode.1} parent=1 // pred_check_branch
      %1744 = sbr.rel (0) target = $region41
    $region40: #{vgae_encode.1} parent=1 // pred_region
      _
    $region41: #{vgae_encode.1} parent=1 // pred_fallthru
      _
    // Predicated region
    $region42: #{vgae_encode.1} parent=1 // pred_check
      _
    $region43: #{vgae_encode.1} parent=1 // pred_check_branch
      %1746 = sbr.rel (0) target = $region45
    $region44: #{vgae_encode.1} parent=1 // pred_region
      _
    $region45: #{vgae_encode.1} parent=1 // pred_fallthru
      _
    %1747 = vsyncpa [#allocation3], 1
    %1748 = vsyncpa [#allocation5], 1

</llo_original>
